<compile_context>
chip_gen: v7x
topology: tpu7x:2x2x1
jax: 0.10.0
libtpu: 0.0.40
codegen_flags: <defaults>
</compile_context>

<pallas_src>
import jax
import jax.numpy as jnp
from jax.experimental import pallas as pl
from jax.experimental.pallas import tpu as pltpu


def _gru_chunk_kernel(gi_ref, lens_ref, whh_ref, bhn_ref, out_ref, hid_ref, h_scr):
    """One grid step == one chunk of Tc time steps of the GRU recurrence.

    gi_ref  : (Tc, Bp, 3H) precomputed x @ W_ih^T + b_ih + [b_hr, b_hz, 0]
    lens_ref: (Bp, 1) int32 sequence lengths (0 for padded batch rows)
    whh_ref : (H, 3H)  W_hh^T   (gate order r, z, n — PyTorch convention)
    bhn_ref : (1, H)   b_hh[n]  (kept separate: it is multiplied by r)
    out_ref : (Tc, Bp, H) padded outputs for this chunk
    hid_ref : (1, Bp, H) final hidden (resident across the time grid axis)
    h_scr   : (Bp, H) VMEM scratch carrying the recurrent state across chunks
    """
    c = pl.program_id(0)
    n_chunks = pl.num_programs(0)
    Tc = gi_ref.shape[0]
    H = whh_ref.shape[0]

    @pl.when(c == 0)
    def _():
        h_scr[...] = jnp.zeros_like(h_scr)

    lens = lens_ref[...]          # (Bp, 1)
    whh = whh_ref[...]            # (H, 3H)
    b_hn = bhn_ref[...]           # (1, H)
    t0 = c * Tc

    def step(i, h):
        gi = gi_ref[i]            # (Bp, 3H)  -- only the recurrent matmul is serial
        gh = jnp.dot(h, whh, preferred_element_type=jnp.float32)   # (Bp, 3H)
        r = jax.nn.sigmoid(gi[:, 0:H] + gh[:, 0:H])
        z = jax.nn.sigmoid(gi[:, H:2 * H] + gh[:, H:2 * H])
        n = jnp.tanh(gi[:, 2 * H:3 * H] + r * (gh[:, 2 * H:3 * H] + b_hn))
        h_new = (1.0 - z) * n + z * h
        valid = (t0 + i) < lens                      # (Bp, 1) bool
        out_ref[i] = jnp.where(valid, h_new, 0.0).astype(out_ref.dtype)
        return jnp.where(valid, h_new, h)            # freeze finished sequences

    h_final = jax.lax.fori_loop(0, Tc, step, h_scr[...], unroll=True)
    h_scr[...] = h_final

    @pl.when(c == n_chunks - 1)
    def _():
        hid_ref[0] = h_final.astype(hid_ref.dtype)   # write final hidden once


def encoder_forward(input_seqs, input_lengths, params, *, time_chunk=32):
    """input_seqs: (T, B) int32 token ids; input_lengths: (B,) int
    (sorted descending, as pack_padded_sequence requires)."""
    E = params["embedding"].astype(jnp.float32)       # (V, D)
    w_ih = params["w_ih"].astype(jnp.float32)         # (3H, D)
    w_hh = params["w_hh"].astype(jnp.float32)         # (3H, H)
    b_ih = params["b_ih"].astype(jnp.float32)         # (3H,)
    b_hh = params["b_hh"].astype(jnp.float32)         # (3H,)
    H = w_hh.shape[1]
    T, B = input_seqs.shape

    # Fold the input projection into the embedding table: one (V,D)x(D,3H)
    # matmul replaces T*B tiny per-step matmuls on the serial critical path.
    # Pre-add b_hh for the r/z gates (they never go through r * (...)).
    b_fold = b_ih + jnp.concatenate([b_hh[:2 * H], jnp.zeros((H,), jnp.float32)])
    proj_table = E @ w_ih.T + b_fold                  # (V, 3H)
    gi = jnp.take(proj_table, input_seqs, axis=0)     # (T, B, 3H)

    whh_t = w_hh.T                                    # (H, 3H)
    b_hn = b_hh[2 * H:][None, :]                      # (1, H)

    # Pad batch to a multiple of 8 (f32 sublanes) and time to a multiple of the
    # chunk size. Padded batch rows get length 0 -> stay zero / frozen; padded
    # time steps are >= every length -> no-ops. Both are sliced off below.
    Bp = -(-B // 8) * 8
    Tc = min(time_chunk, T)
    Tp = -(-T // Tc) * Tc

    gi = jnp.pad(gi, ((0, Tp - T), (0, Bp - B), (0, 0)))
    lens2d = jnp.pad(input_lengths.astype(jnp.int32), (0, Bp - B))[:, None]

    outputs, hidden = pl.pallas_call(
        _gru_chunk_kernel,
        out_shape=(
            jax.ShapeDtypeStruct((Tp, Bp, H), jnp.float32),   # padded outputs
            jax.ShapeDtypeStruct((1, Bp, H), jnp.float32),    # hidden (num_layers=1)
        ),
        grid_spec=pltpu.PrefetchScalarGridSpec(
            num_scalar_prefetch=0,
            grid=(Tp // Tc,),
            in_specs=[
                pl.BlockSpec((Tc, Bp, 3 * H), lambda c: (c, 0, 0)),   # gi chunk
                pl.BlockSpec((Bp, 1), lambda c: (0, 0)),              # lengths
                pl.BlockSpec((H, 3 * H), lambda c: (0, 0)),           # W_hh^T
                pl.BlockSpec((1, H), lambda c: (0, 0)),               # b_hn
            ],
            out_specs=[
                pl.BlockSpec((Tc, Bp, H), lambda c: (c, 0, 0)),
                pl.BlockSpec((1, Bp, H), lambda c: (0, 0, 0)),        # resident
            ],
            scratch_shapes=[pltpu.VMEM((Bp, H), jnp.float32)],
        ),
        compiler_params=pltpu.CompilerParams(
            dimension_semantics=("arbitrary",)),                       # serial in time
    )(gi, lens2d, whh_t, b_hn)

    return outputs[:T, :B], hidden[:, :B]


def init_params(key, vocab_size, input_size, hidden_size):
    """Deterministic parameter init mirroring the PyTorch module's __init__."""
    k_emb, k_ih, k_hh, k_bih, k_bhh = jax.random.split(key, 5)
    H = hidden_size
    bound = 1.0 / (H ** 0.5)
    params = {
        # load_embedding: uniform(-0.25, 0.25)
        "embedding": jax.random.uniform(k_emb, (vocab_size, input_size),
                                        jnp.float32, -0.25, 0.25),
        # init_weights: orthogonal(weight_ih_l0)  shape (3H, D)
        "w_ih": jax.nn.initializers.orthogonal()(k_ih, (3 * H, input_size), jnp.float32),
        # init_weights: uniform(weight_hh_l0, -0.01, 0.01)  shape (3H, H)
        "w_hh": jax.random.uniform(k_hh, (3 * H, H), jnp.float32, -0.01, 0.01),
        # nn.GRU default bias init: uniform(-1/sqrt(H), 1/sqrt(H))
        "b_ih": jax.random.uniform(k_bih, (3 * H,), jnp.float32, -bound, bound),
        "b_hh": jax.random.uniform(k_bhh, (3 * H,), jnp.float32, -bound, bound),
    }
    return params


def _reference_forward(input_seqs, input_lengths, params):
    """Pure-JAX reference (lax.scan, unfolded GRU) for a correctness check."""
    emb = jnp.take(params["embedding"], input_seqs, axis=0)
    T, B, D = emb.shape
    H = params["w_hh"].shape[1]
    wih_t, whh_t = params["w_ih"].T, params["w_hh"].T
    bih, bhh = params["b_ih"], params["b_hh"]
    lens = input_lengths.astype(jnp.int32)

    def step(h, xt_t):
        x_t, t = xt_t
        gi = x_t @ wih_t + bih
        gh = h @ whh_t + bhh
        i_r, i_z, i_n = gi[:, :H], gi[:, H:2 * H], gi[:, 2 * H:]
        h_r, h_z, h_n = gh[:, :H], gh[:, H:2 * H], gh[:, 2 * H:]
        r = jax.nn.sigmoid(i_r + h_r)
        z = jax.nn.sigmoid(i_z + h_z)
        n = jnp.tanh(i_n + r * h_n)
        h_new = (1.0 - z) * n + z * h
        valid = (t < lens)[:, None]
        h_next = jnp.where(valid, h_new, h)
        out = jnp.where(valid, h_new, 0.0)
        return h_next, out

    h0 = jnp.zeros((B, H), jnp.float32)
    h_final, outs = jax.lax.scan(step, h0, (emb, jnp.arange(T, dtype=jnp.int32)))
    return outs, h_final[None]


if __name__ == "__main__":
    # Small shapes implied by the module: seq T=8, batch B=4, embed D=16, hidden H=32.
    T, B, D, H, V = 8, 4, 16, 32, 20

    key = jax.random.PRNGKey(0)
    k_params, k_seq = jax.random.split(key)
    params = init_params(k_params, vocab_size=V, input_size=D, hidden_size=H)

    # Time-major token ids (T, B); lengths sorted descending (pack_padded_sequence req).
    input_seqs = jax.random.randint(k_seq, (T, B), 1, V, dtype=jnp.int32)
    input_lengths = jnp.array([8, 6, 5, 3], dtype=jnp.int32)

    outputs, hidden = jax.jit(encoder_forward)(input_seqs, input_lengths, params)
    outputs, hidden = jax.block_until_ready((outputs, hidden))

    # Sanity check against a pure-JAX reference.
    ref_out, ref_hid = _reference_forward(input_seqs, input_lengths, params)
    assert outputs.shape == (T, B, H) and hidden.shape == (1, B, H)
    assert jnp.allclose(outputs, ref_out, atol=1e-3, rtol=1e-3)
    assert jnp.allclose(hidden, ref_hid, atol=1e-3, rtol=1e-3)

    print("KERNEL_OK")
</pallas_src>

<mosaic_0001>
module attributes {stable_mosaic.version = 11 : i64} {
  func.func @_gru_chunk_kernel(%arg0: i32, %arg1: memref<8x8x96xf32, #tpu.memory_space<vmem>>, %arg2: memref<8x1xi32, #tpu.memory_space<vmem>>, %arg3: memref<32x96xf32, #tpu.memory_space<vmem>>, %arg4: memref<1x32xf32, #tpu.memory_space<vmem>>, %arg5: memref<8x8x32xf32, #tpu.memory_space<vmem>>, %arg6: memref<1x8x32xf32, #tpu.memory_space<vmem>>, %arg7: memref<8x32xf32, #tpu.memory_space<vmem>>) attributes {dimension_semantics = [#tpu.dimension_semantics<arbitrary>], iteration_bounds = array<i64: 1>, scalar_prefetch = 0 : i64, scratch_operands = 1 : i64, tpu.core_type = #tpu.core_type<tc>, window_params = [{transform_indices = @transform_0, window_bounds = array<i64: 8, 8, 96>}, {pipeline_mode = #tpu.pipeline_mode<synchronous>, transform_indices = @transform_1, window_bounds = array<i64: 8, 1>}, {pipeline_mode = #tpu.pipeline_mode<synchronous>, transform_indices = @transform_2, window_bounds = array<i64: 32, 96>}, {pipeline_mode = #tpu.pipeline_mode<synchronous>, transform_indices = @transform_3, window_bounds = array<i64: 1, 32>}, {transform_indices = @transform_4, window_bounds = array<i64: 8, 8, 32>}, {pipeline_mode = #tpu.pipeline_mode<synchronous>, transform_indices = @transform_5, window_bounds = array<i64: 1, 8, 32>}]} {
    %c0_i32 = arith.constant 0 : i32
    %0 = arith.cmpi eq, %arg0, %c0_i32 : i32
    %1 = arith.extui %0 : i1 to i32
    %c0_i32_0 = arith.constant 0 : i32
    %2 = arith.cmpi ne, %1, %c0_i32_0 : i32
    scf.if %2 {
      %cst_85 = arith.constant 0.000000e+00 : f32
      %380 = vector.broadcast %cst_85 : f32 to vector<8x32xf32>
      %c0_86 = arith.constant 0 : index
      %c0_87 = arith.constant 0 : index
      %381 = vector.load %arg7[%c0_86, %c0_87] : memref<8x32xf32, #tpu.memory_space<vmem>>, vector<8x32xf32>
      tpu.vector_store %arg7[%c0_86, %c0_87], %380 {strides = array<i32>} : memref<8x32xf32, #tpu.memory_space<vmem>>, vector<8x32xf32>,
    } else {
    }
    %c0 = arith.constant 0 : index
    %c0_1 = arith.constant 0 : index
    %3 = vector.load %arg2[%c0, %c0_1] : memref<8x1xi32, #tpu.memory_space<vmem>>, vector<8x1xi32>
    %c0_2 = arith.constant 0 : index
    %c0_3 = arith.constant 0 : index
    %4 = vector.load %arg3[%c0_2, %c0_3] : memref<32x96xf32, #tpu.memory_space<vmem>>, vector<32x96xf32>
    %c0_4 = arith.constant 0 : index
    %c0_5 = arith.constant 0 : index
    %5 = vector.load %arg4[%c0_4, %c0_5] : memref<1x32xf32, #tpu.memory_space<vmem>>, vector<1x32xf32>
    %c8_i32 = arith.constant 8 : i32
    %6 = arith.muli %arg0, %c8_i32 : i32
    %c0_6 = arith.constant 0 : index
    %c0_7 = arith.constant 0 : index
    %7 = vector.load %arg7[%c0_6, %c0_7] : memref<8x32xf32, #tpu.memory_space<vmem>>, vector<8x32xf32>
    %c0_i32_8 = arith.constant 0 : i32
    %8 = arith.index_cast %c0_i32_8 : i32 to index
    %c0_9 = arith.constant 0 : index
    %c0_10 = arith.constant 0 : index
    %9 = vector.load %arg1[%8, %c0_9, %c0_10] : memref<8x8x96xf32, #tpu.memory_space<vmem>>, vector<1x8x96xf32>
    %10 = vector.shape_cast %9 : vector<1x8x96xf32> to vector<8x96xf32>
    %cst = arith.constant dense<0.000000e+00> : vector<8x96xf32>
    %11 = tpu.matmul %7, %4, %cst {dimension_numbers = #tpu.dot_dimension_numbers<[1], [0], [0], [1], [0, 0, 1, 1], [], []>} : vector<8x32xf32>, vector<32x96xf32>, vector<8x96xf32> -> vector<8x96xf32>
    %12 = vector.extract_strided_slice %10 {offsets = [0, 0], sizes = [8, 32], strides = [1, 1]} : vector<8x96xf32> to vector<8x32xf32>
    %13 = vector.extract_strided_slice %11 {offsets = [0, 0], sizes = [8, 32], strides = [1, 1]} : vector<8x96xf32> to vector<8x32xf32>
    %14 = arith.addf %12, %13 : vector<8x32xf32>
    %15 = arith.negf %14 : vector<8x32xf32>
    %16 = math.exp %15 : vector<8x32xf32>
    %cst_11 = arith.constant 1.000000e+00 : f32
    %17 = vector.broadcast %cst_11 : f32 to vector<8x32xf32>
    %18 = arith.addf %17, %16 : vector<8x32xf32>
    %19 = arith.divf %17, %18 : vector<8x32xf32>
    %20 = vector.extract_strided_slice %10 {offsets = [0, 32], sizes = [8, 32], strides = [1, 1]} : vector<8x96xf32> to vector<8x32xf32>
    %21 = vector.extract_strided_slice %11 {offsets = [0, 32], sizes = [8, 32], strides = [1, 1]} : vector<8x96xf32> to vector<8x32xf32>
    %22 = arith.addf %20, %21 : vector<8x32xf32>
    %23 = arith.negf %22 : vector<8x32xf32>
    %24 = math.exp %23 : vector<8x32xf32>
    %cst_12 = arith.constant 1.000000e+00 : f32
    %25 = vector.broadcast %cst_12 : f32 to vector<8x32xf32>
    %26 = arith.addf %25, %24 : vector<8x32xf32>
    %27 = arith.divf %25, %26 : vector<8x32xf32>
    %28 = vector.extract_strided_slice %10 {offsets = [0, 64], sizes = [8, 32], strides = [1, 1]} : vector<8x96xf32> to vector<8x32xf32>
    %29 = vector.extract_strided_slice %11 {offsets = [0, 64], sizes = [8, 32], strides = [1, 1]} : vector<8x96xf32> to vector<8x32xf32>
    %30 = vector.broadcast %5 : vector<1x32xf32> to vector<8x32xf32>
    %31 = arith.addf %29, %30 : vector<8x32xf32>
    %32 = arith.mulf %19, %31 : vector<8x32xf32>
    %33 = arith.addf %28, %32 : vector<8x32xf32>
    %34 = math.tanh %33 : vector<8x32xf32>
    %cst_13 = arith.constant 1.000000e+00 : f32
    %35 = vector.broadcast %cst_13 : f32 to vector<8x32xf32>
    %36 = arith.subf %35, %27 : vector<8x32xf32>
    %37 = arith.mulf %36, %34 : vector<8x32xf32>
    %38 = arith.mulf %27, %7 : vector<8x32xf32>
    %39 = arith.addf %37, %38 : vector<8x32xf32>
    %40 = arith.addi %6, %c0_i32_8 : i32
    %41 = vector.broadcast %40 : i32 to vector<8x1xi32>
    %42 = arith.cmpi slt, %41, %3 : vector<8x1xi32>
    %cst_14 = arith.constant 0.000000e+00 : f32
    %43 = vector.shape_cast %42 : vector<8x1xi1> to vector<8x1xi1>
    %44 = vector.broadcast %43 : vector<8x1xi1> to vector<8x32xi1>
    %45 = vector.broadcast %cst_14 : f32 to vector<8x32xf32>
    %46 = arith.select %44, %39, %45 : vector<8x32xi1>, vector<8x32xf32>
    %47 = arith.index_cast %c0_i32_8 : i32 to index
    %c0_15 = arith.constant 0 : index
    %c0_16 = arith.constant 0 : index
    %48 = vector.load %arg5[%47, %c0_15, %c0_16] : memref<8x8x32xf32, #tpu.memory_space<vmem>>, vector<1x8x32xf32>
    %49 = vector.shape_cast %48 : vector<1x8x32xf32> to vector<8x32xf32>
    %50 = vector.shape_cast %46 : vector<8x32xf32> to vector<1x8x32xf32>
    tpu.vector_store %arg5[%47, %c0_15, %c0_16], %50 {strides = array<i32>} : memref<8x8x32xf32, #tpu.memory_space<vmem>>, vector<1x8x32xf32>,
    %51 = vector.shape_cast %42 : vector<8x1xi1> to vector<8x1xi1>
    %52 = vector.broadcast %51 : vector<8x1xi1> to vector<8x32xi1>
    %53 = arith.select %52, %39, %7 : vector<8x32xi1>, vector<8x32xf32>
    %c1_i32 = arith.constant 1 : i32
    %54 = arith.index_cast %c1_i32 : i32 to index
    %c0_17 = arith.constant 0 : index
    %c0_18 = arith.constant 0 : index
    %55 = vector.load %arg1[%54, %c0_17, %c0_18] : memref<8x8x96xf32, #tpu.memory_space<vmem>>, vector<1x8x96xf32>
    %56 = vector.shape_cast %55 : vector<1x8x96xf32> to vector<8x96xf32>
    %cst_19 = arith.constant dense<0.000000e+00> : vector<8x96xf32>
    %57 = tpu.matmul %53, %4, %cst_19 {dimension_numbers = #tpu.dot_dimension_numbers<[1], [0], [0], [1], [0, 0, 1, 1], [], []>} : vector<8x32xf32>, vector<32x96xf32>, vector<8x96xf32> -> vector<8x96xf32>
    %58 = vector.extract_strided_slice %56 {offsets = [0, 0], sizes = [8, 32], strides = [1, 1]} : vector<8x96xf32> to vector<8x32xf32>
    %59 = vector.extract_strided_slice %57 {offsets = [0, 0], sizes = [8, 32], strides = [1, 1]} : vector<8x96xf32> to vector<8x32xf32>
    %60 = arith.addf %58, %59 : vector<8x32xf32>
    %61 = arith.negf %60 : vector<8x32xf32>
    %62 = math.exp %61 : vector<8x32xf32>
    %cst_20 = arith.constant 1.000000e+00 : f32
    %63 = vector.broadcast %cst_20 : f32 to vector<8x32xf32>
    %64 = arith.addf %63, %62 : vector<8x32xf32>
    %65 = arith.divf %63, %64 : vector<8x32xf32>
    %66 = vector.extract_strided_slice %56 {offsets = [0, 32], sizes = [8, 32], strides = [1, 1]} : vector<8x96xf32> to vector<8x32xf32>
    %67 = vector.extract_strided_slice %57 {offsets = [0, 32], sizes = [8, 32], strides = [1, 1]} : vector<8x96xf32> to vector<8x32xf32>
    %68 = arith.addf %66, %67 : vector<8x32xf32>
    %69 = arith.negf %68 : vector<8x32xf32>
    %70 = math.exp %69 : vector<8x32xf32>
    %cst_21 = arith.constant 1.000000e+00 : f32
    %71 = vector.broadcast %cst_21 : f32 to vector<8x32xf32>
    %72 = arith.addf %71, %70 : vector<8x32xf32>
    %73 = arith.divf %71, %72 : vector<8x32xf32>
    %74 = vector.extract_strided_slice %56 {offsets = [0, 64], sizes = [8, 32], strides = [1, 1]} : vector<8x96xf32> to vector<8x32xf32>
    %75 = vector.extract_strided_slice %57 {offsets = [0, 64], sizes = [8, 32], strides = [1, 1]} : vector<8x96xf32> to vector<8x32xf32>
    %76 = vector.broadcast %5 : vector<1x32xf32> to vector<8x32xf32>
    %77 = arith.addf %75, %76 : vector<8x32xf32>
    %78 = arith.mulf %65, %77 : vector<8x32xf32>
    %79 = arith.addf %74, %78 : vector<8x32xf32>
    %80 = math.tanh %79 : vector<8x32xf32>
    %cst_22 = arith.constant 1.000000e+00 : f32
    %81 = vector.broadcast %cst_22 : f32 to vector<8x32xf32>
    %82 = arith.subf %81, %73 : vector<8x32xf32>
    %83 = arith.mulf %82, %80 : vector<8x32xf32>
    %84 = arith.mulf %73, %53 : vector<8x32xf32>
    %85 = arith.addf %83, %84 : vector<8x32xf32>
    %86 = arith.addi %6, %c1_i32 : i32
    %87 = vector.broadcast %86 : i32 to vector<8x1xi32>
    %88 = arith.cmpi slt, %87, %3 : vector<8x1xi32>
    %cst_23 = arith.constant 0.000000e+00 : f32
    %89 = vector.shape_cast %88 : vector<8x1xi1> to vector<8x1xi1>
    %90 = vector.broadcast %89 : vector<8x1xi1> to vector<8x32xi1>
    %91 = vector.broadcast %cst_23 : f32 to vector<8x32xf32>
    %92 = arith.select %90, %85, %91 : vector<8x32xi1>, vector<8x32xf32>
    %93 = arith.index_cast %c1_i32 : i32 to index
    %c0_24 = arith.constant 0 : index
    %c0_25 = arith.constant 0 : index
    %94 = vector.load %arg5[%93, %c0_24, %c0_25] : memref<8x8x32xf32, #tpu.memory_space<vmem>>, vector<1x8x32xf32>
    %95 = vector.shape_cast %94 : vector<1x8x32xf32> to vector<8x32xf32>
    %96 = vector.shape_cast %92 : vector<8x32xf32> to vector<1x8x32xf32>
    tpu.vector_store %arg5[%93, %c0_24, %c0_25], %96 {strides = array<i32>} : memref<8x8x32xf32, #tpu.memory_space<vmem>>, vector<1x8x32xf32>,
    %97 = vector.shape_cast %88 : vector<8x1xi1> to vector<8x1xi1>
    %98 = vector.broadcast %97 : vector<8x1xi1> to vector<8x32xi1>
    %99 = arith.select %98, %85, %53 : vector<8x32xi1>, vector<8x32xf32>
    %c2_i32 = arith.constant 2 : i32
    %100 = arith.index_cast %c2_i32 : i32 to index
    %c0_26 = arith.constant 0 : index
    %c0_27 = arith.constant 0 : index
    %101 = vector.load %arg1[%100, %c0_26, %c0_27] : memref<8x8x96xf32, #tpu.memory_space<vmem>>, vector<1x8x96xf32>
    %102 = vector.shape_cast %101 : vector<1x8x96xf32> to vector<8x96xf32>
    %cst_28 = arith.constant dense<0.000000e+00> : vector<8x96xf32>
    %103 = tpu.matmul %99, %4, %cst_28 {dimension_numbers = #tpu.dot_dimension_numbers<[1], [0], [0], [1], [0, 0, 1, 1], [], []>} : vector<8x32xf32>, vector<32x96xf32>, vector<8x96xf32> -> vector<8x96xf32>
    %104 = vector.extract_strided_slice %102 {offsets = [0, 0], sizes = [8, 32], strides = [1, 1]} : vector<8x96xf32> to vector<8x32xf32>
    %105 = vector.extract_strided_slice %103 {offsets = [0, 0], sizes = [8, 32], strides = [1, 1]} : vector<8x96xf32> to vector<8x32xf32>
    %106 = arith.addf %104, %105 : vector<8x32xf32>
    %107 = arith.negf %106 : vector<8x32xf32>
    %108 = math.exp %107 : vector<8x32xf32>
    %cst_29 = arith.constant 1.000000e+00 : f32
    %109 = vector.broadcast %cst_29 : f32 to vector<8x32xf32>
    %110 = arith.addf %109, %108 : vector<8x32xf32>
    %111 = arith.divf %109, %110 : vector<8x32xf32>
    %112 = vector.extract_strided_slice %102 {offsets = [0, 32], sizes = [8, 32], strides = [1, 1]} : vector<8x96xf32> to vector<8x32xf32>
    %113 = vector.extract_strided_slice %103 {offsets = [0, 32], sizes = [8, 32], strides = [1, 1]} : vector<8x96xf32> to vector<8x32xf32>
    %114 = arith.addf %112, %113 : vector<8x32xf32>
    %115 = arith.negf %114 : vector<8x32xf32>
    %116 = math.exp %115 : vector<8x32xf32>
    %cst_30 = arith.constant 1.000000e+00 : f32
    %117 = vector.broadcast %cst_30 : f32 to vector<8x32xf32>
    %118 = arith.addf %117, %116 : vector<8x32xf32>
    %119 = arith.divf %117, %118 : vector<8x32xf32>
    %120 = vector.extract_strided_slice %102 {offsets = [0, 64], sizes = [8, 32], strides = [1, 1]} : vector<8x96xf32> to vector<8x32xf32>
    %121 = vector.extract_strided_slice %103 {offsets = [0, 64], sizes = [8, 32], strides = [1, 1]} : vector<8x96xf32> to vector<8x32xf32>
    %122 = vector.broadcast %5 : vector<1x32xf32> to vector<8x32xf32>
    %123 = arith.addf %121, %122 : vector<8x32xf32>
    %124 = arith.mulf %111, %123 : vector<8x32xf32>
    %125 = arith.addf %120, %124 : vector<8x32xf32>
    %126 = math.tanh %125 : vector<8x32xf32>
    %cst_31 = arith.constant 1.000000e+00 : f32
    %127 = vector.broadcast %cst_31 : f32 to vector<8x32xf32>
    %128 = arith.subf %127, %119 : vector<8x32xf32>
    %129 = arith.mulf %128, %126 : vector<8x32xf32>
    %130 = arith.mulf %119, %99 : vector<8x32xf32>
    %131 = arith.addf %129, %130 : vector<8x32xf32>
    %132 = arith.addi %6, %c2_i32 : i32
    %133 = vector.broadcast %132 : i32 to vector<8x1xi32>
    %134 = arith.cmpi slt, %133, %3 : vector<8x1xi32>
    %cst_32 = arith.constant 0.000000e+00 : f32
    %135 = vector.shape_cast %134 : vector<8x1xi1> to vector<8x1xi1>
    %136 = vector.broadcast %135 : vector<8x1xi1> to vector<8x32xi1>
    %137 = vector.broadcast %cst_32 : f32 to vector<8x32xf32>
    %138 = arith.select %136, %131, %137 : vector<8x32xi1>, vector<8x32xf32>
    %139 = arith.index_cast %c2_i32 : i32 to index
    %c0_33 = arith.constant 0 : index
    %c0_34 = arith.constant 0 : index
    %140 = vector.load %arg5[%139, %c0_33, %c0_34] : memref<8x8x32xf32, #tpu.memory_space<vmem>>, vector<1x8x32xf32>
    %141 = vector.shape_cast %140 : vector<1x8x32xf32> to vector<8x32xf32>
    %142 = vector.shape_cast %138 : vector<8x32xf32> to vector<1x8x32xf32>
    tpu.vector_store %arg5[%139, %c0_33, %c0_34], %142 {strides = array<i32>} : memref<8x8x32xf32, #tpu.memory_space<vmem>>, vector<1x8x32xf32>,
    %143 = vector.shape_cast %134 : vector<8x1xi1> to vector<8x1xi1>
    %144 = vector.broadcast %143 : vector<8x1xi1> to vector<8x32xi1>
    %145 = arith.select %144, %131, %99 : vector<8x32xi1>, vector<8x32xf32>
    %c3_i32 = arith.constant 3 : i32
    %146 = arith.index_cast %c3_i32 : i32 to index
    %c0_35 = arith.constant 0 : index
    %c0_36 = arith.constant 0 : index
    %147 = vector.load %arg1[%146, %c0_35, %c0_36] : memref<8x8x96xf32, #tpu.memory_space<vmem>>, vector<1x8x96xf32>
    %148 = vector.shape_cast %147 : vector<1x8x96xf32> to vector<8x96xf32>
    %cst_37 = arith.constant dense<0.000000e+00> : vector<8x96xf32>
    %149 = tpu.matmul %145, %4, %cst_37 {dimension_numbers = #tpu.dot_dimension_numbers<[1], [0], [0], [1], [0, 0, 1, 1], [], []>} : vector<8x32xf32>, vector<32x96xf32>, vector<8x96xf32> -> vector<8x96xf32>
    %150 = vector.extract_strided_slice %148 {offsets = [0, 0], sizes = [8, 32], strides = [1, 1]} : vector<8x96xf32> to vector<8x32xf32>
    %151 = vector.extract_strided_slice %149 {offsets = [0, 0], sizes = [8, 32], strides = [1, 1]} : vector<8x96xf32> to vector<8x32xf32>
    %152 = arith.addf %150, %151 : vector<8x32xf32>
    %153 = arith.negf %152 : vector<8x32xf32>
    %154 = math.exp %153 : vector<8x32xf32>
    %cst_38 = arith.constant 1.000000e+00 : f32
    %155 = vector.broadcast %cst_38 : f32 to vector<8x32xf32>
    %156 = arith.addf %155, %154 : vector<8x32xf32>
    %157 = arith.divf %155, %156 : vector<8x32xf32>
    %158 = vector.extract_strided_slice %148 {offsets = [0, 32], sizes = [8, 32], strides = [1, 1]} : vector<8x96xf32> to vector<8x32xf32>
    %159 = vector.extract_strided_slice %149 {offsets = [0, 32], sizes = [8, 32], strides = [1, 1]} : vector<8x96xf32> to vector<8x32xf32>
    %160 = arith.addf %158, %159 : vector<8x32xf32>
    %161 = arith.negf %160 : vector<8x32xf32>
    %162 = math.exp %161 : vector<8x32xf32>
    %cst_39 = arith.constant 1.000000e+00 : f32
    %163 = vector.broadcast %cst_39 : f32 to vector<8x32xf32>
    %164 = arith.addf %163, %162 : vector<8x32xf32>
    %165 = arith.divf %163, %164 : vector<8x32xf32>
    %166 = vector.extract_strided_slice %148 {offsets = [0, 64], sizes = [8, 32], strides = [1, 1]} : vector<8x96xf32> to vector<8x32xf32>
    %167 = vector.extract_strided_slice %149 {offsets = [0, 64], sizes = [8, 32], strides = [1, 1]} : vector<8x96xf32> to vector<8x32xf32>
    %168 = vector.broadcast %5 : vector<1x32xf32> to vector<8x32xf32>
    %169 = arith.addf %167, %168 : vector<8x32xf32>
    %170 = arith.mulf %157, %169 : vector<8x32xf32>
    %171 = arith.addf %166, %170 : vector<8x32xf32>
    %172 = math.tanh %171 : vector<8x32xf32>
    %cst_40 = arith.constant 1.000000e+00 : f32
    %173 = vector.broadcast %cst_40 : f32 to vector<8x32xf32>
    %174 = arith.subf %173, %165 : vector<8x32xf32>
    %175 = arith.mulf %174, %172 : vector<8x32xf32>
    %176 = arith.mulf %165, %145 : vector<8x32xf32>
    %177 = arith.addf %175, %176 : vector<8x32xf32>
    %178 = arith.addi %6, %c3_i32 : i32
    %179 = vector.broadcast %178 : i32 to vector<8x1xi32>
    %180 = arith.cmpi slt, %179, %3 : vector<8x1xi32>
    %cst_41 = arith.constant 0.000000e+00 : f32
    %181 = vector.shape_cast %180 : vector<8x1xi1> to vector<8x1xi1>
    %182 = vector.broadcast %181 : vector<8x1xi1> to vector<8x32xi1>
    %183 = vector.broadcast %cst_41 : f32 to vector<8x32xf32>
    %184 = arith.select %182, %177, %183 : vector<8x32xi1>, vector<8x32xf32>
    %185 = arith.index_cast %c3_i32 : i32 to index
    %c0_42 = arith.constant 0 : index
    %c0_43 = arith.constant 0 : index
    %186 = vector.load %arg5[%185, %c0_42, %c0_43] : memref<8x8x32xf32, #tpu.memory_space<vmem>>, vector<1x8x32xf32>
    %187 = vector.shape_cast %186 : vector<1x8x32xf32> to vector<8x32xf32>
    %188 = vector.shape_cast %184 : vector<8x32xf32> to vector<1x8x32xf32>
    tpu.vector_store %arg5[%185, %c0_42, %c0_43], %188 {strides = array<i32>} : memref<8x8x32xf32, #tpu.memory_space<vmem>>, vector<1x8x32xf32>,
    %189 = vector.shape_cast %180 : vector<8x1xi1> to vector<8x1xi1>
    %190 = vector.broadcast %189 : vector<8x1xi1> to vector<8x32xi1>
    %191 = arith.select %190, %177, %145 : vector<8x32xi1>, vector<8x32xf32>
    %c4_i32 = arith.constant 4 : i32
    %192 = arith.index_cast %c4_i32 : i32 to index
    %c0_44 = arith.constant 0 : index
    %c0_45 = arith.constant 0 : index
    %193 = vector.load %arg1[%192, %c0_44, %c0_45] : memref<8x8x96xf32, #tpu.memory_space<vmem>>, vector<1x8x96xf32>
    %194 = vector.shape_cast %193 : vector<1x8x96xf32> to vector<8x96xf32>
    %cst_46 = arith.constant dense<0.000000e+00> : vector<8x96xf32>
    %195 = tpu.matmul %191, %4, %cst_46 {dimension_numbers = #tpu.dot_dimension_numbers<[1], [0], [0], [1], [0, 0, 1, 1], [], []>} : vector<8x32xf32>, vector<32x96xf32>, vector<8x96xf32> -> vector<8x96xf32>
    %196 = vector.extract_strided_slice %194 {offsets = [0, 0], sizes = [8, 32], strides = [1, 1]} : vector<8x96xf32> to vector<8x32xf32>
    %197 = vector.extract_strided_slice %195 {offsets = [0, 0], sizes = [8, 32], strides = [1, 1]} : vector<8x96xf32> to vector<8x32xf32>
    %198 = arith.addf %196, %197 : vector<8x32xf32>
    %199 = arith.negf %198 : vector<8x32xf32>
    %200 = math.exp %199 : vector<8x32xf32>
    %cst_47 = arith.constant 1.000000e+00 : f32
    %201 = vector.broadcast %cst_47 : f32 to vector<8x32xf32>
    %202 = arith.addf %201, %200 : vector<8x32xf32>
    %203 = arith.divf %201, %202 : vector<8x32xf32>
    %204 = vector.extract_strided_slice %194 {offsets = [0, 32], sizes = [8, 32], strides = [1, 1]} : vector<8x96xf32> to vector<8x32xf32>
    %205 = vector.extract_strided_slice %195 {offsets = [0, 32], sizes = [8, 32], strides = [1, 1]} : vector<8x96xf32> to vector<8x32xf32>
    %206 = arith.addf %204, %205 : vector<8x32xf32>
    %207 = arith.negf %206 : vector<8x32xf32>
    %208 = math.exp %207 : vector<8x32xf32>
    %cst_48 = arith.constant 1.000000e+00 : f32
    %209 = vector.broadcast %cst_48 : f32 to vector<8x32xf32>
    %210 = arith.addf %209, %208 : vector<8x32xf32>
    %211 = arith.divf %209, %210 : vector<8x32xf32>
    %212 = vector.extract_strided_slice %194 {offsets = [0, 64], sizes = [8, 32], strides = [1, 1]} : vector<8x96xf32> to vector<8x32xf32>
    %213 = vector.extract_strided_slice %195 {offsets = [0, 64], sizes = [8, 32], strides = [1, 1]} : vector<8x96xf32> to vector<8x32xf32>
    %214 = vector.broadcast %5 : vector<1x32xf32> to vector<8x32xf32>
    %215 = arith.addf %213, %214 : vector<8x32xf32>
    %216 = arith.mulf %203, %215 : vector<8x32xf32>
    %217 = arith.addf %212, %216 : vector<8x32xf32>
    %218 = math.tanh %217 : vector<8x32xf32>
    %cst_49 = arith.constant 1.000000e+00 : f32
    %219 = vector.broadcast %cst_49 : f32 to vector<8x32xf32>
    %220 = arith.subf %219, %211 : vector<8x32xf32>
    %221 = arith.mulf %220, %218 : vector<8x32xf32>
    %222 = arith.mulf %211, %191 : vector<8x32xf32>
    %223 = arith.addf %221, %222 : vector<8x32xf32>
    %224 = arith.addi %6, %c4_i32 : i32
    %225 = vector.broadcast %224 : i32 to vector<8x1xi32>
    %226 = arith.cmpi slt, %225, %3 : vector<8x1xi32>
    %cst_50 = arith.constant 0.000000e+00 : f32
    %227 = vector.shape_cast %226 : vector<8x1xi1> to vector<8x1xi1>
    %228 = vector.broadcast %227 : vector<8x1xi1> to vector<8x32xi1>
    %229 = vector.broadcast %cst_50 : f32 to vector<8x32xf32>
    %230 = arith.select %228, %223, %229 : vector<8x32xi1>, vector<8x32xf32>
    %231 = arith.index_cast %c4_i32 : i32 to index
    %c0_51 = arith.constant 0 : index
    %c0_52 = arith.constant 0 : index
    %232 = vector.load %arg5[%231, %c0_51, %c0_52] : memref<8x8x32xf32, #tpu.memory_space<vmem>>, vector<1x8x32xf32>
    %233 = vector.shape_cast %232 : vector<1x8x32xf32> to vector<8x32xf32>
    %234 = vector.shape_cast %230 : vector<8x32xf32> to vector<1x8x32xf32>
    tpu.vector_store %arg5[%231, %c0_51, %c0_52], %234 {strides = array<i32>} : memref<8x8x32xf32, #tpu.memory_space<vmem>>, vector<1x8x32xf32>,
    %235 = vector.shape_cast %226 : vector<8x1xi1> to vector<8x1xi1>
    %236 = vector.broadcast %235 : vector<8x1xi1> to vector<8x32xi1>
    %237 = arith.select %236, %223, %191 : vector<8x32xi1>, vector<8x32xf32>
    %c5_i32 = arith.constant 5 : i32
    %238 = arith.index_cast %c5_i32 : i32 to index
    %c0_53 = arith.constant 0 : index
    %c0_54 = arith.constant 0 : index
    %239 = vector.load %arg1[%238, %c0_53, %c0_54] : memref<8x8x96xf32, #tpu.memory_space<vmem>>, vector<1x8x96xf32>
    %240 = vector.shape_cast %239 : vector<1x8x96xf32> to vector<8x96xf32>
    %cst_55 = arith.constant dense<0.000000e+00> : vector<8x96xf32>
    %241 = tpu.matmul %237, %4, %cst_55 {dimension_numbers = #tpu.dot_dimension_numbers<[1], [0], [0], [1], [0, 0, 1, 1], [], []>} : vector<8x32xf32>, vector<32x96xf32>, vector<8x96xf32> -> vector<8x96xf32>
    %242 = vector.extract_strided_slice %240 {offsets = [0, 0], sizes = [8, 32], strides = [1, 1]} : vector<8x96xf32> to vector<8x32xf32>
    %243 = vector.extract_strided_slice %241 {offsets = [0, 0], sizes = [8, 32], strides = [1, 1]} : vector<8x96xf32> to vector<8x32xf32>
    %244 = arith.addf %242, %243 : vector<8x32xf32>
    %245 = arith.negf %244 : vector<8x32xf32>
    %246 = math.exp %245 : vector<8x32xf32>
    %cst_56 = arith.constant 1.000000e+00 : f32
    %247 = vector.broadcast %cst_56 : f32 to vector<8x32xf32>
    %248 = arith.addf %247, %246 : vector<8x32xf32>
    %249 = arith.divf %247, %248 : vector<8x32xf32>
    %250 = vector.extract_strided_slice %240 {offsets = [0, 32], sizes = [8, 32], strides = [1, 1]} : vector<8x96xf32> to vector<8x32xf32>
    %251 = vector.extract_strided_slice %241 {offsets = [0, 32], sizes = [8, 32], strides = [1, 1]} : vector<8x96xf32> to vector<8x32xf32>
    %252 = arith.addf %250, %251 : vector<8x32xf32>
    %253 = arith.negf %252 : vector<8x32xf32>
    %254 = math.exp %253 : vector<8x32xf32>
    %cst_57 = arith.constant 1.000000e+00 : f32
    %255 = vector.broadcast %cst_57 : f32 to vector<8x32xf32>
    %256 = arith.addf %255, %254 : vector<8x32xf32>
    %257 = arith.divf %255, %256 : vector<8x32xf32>
    %258 = vector.extract_strided_slice %240 {offsets = [0, 64], sizes = [8, 32], strides = [1, 1]} : vector<8x96xf32> to vector<8x32xf32>
    %259 = vector.extract_strided_slice %241 {offsets = [0, 64], sizes = [8, 32], strides = [1, 1]} : vector<8x96xf32> to vector<8x32xf32>
    %260 = vector.broadcast %5 : vector<1x32xf32> to vector<8x32xf32>
    %261 = arith.addf %259, %260 : vector<8x32xf32>
    %262 = arith.mulf %249, %261 : vector<8x32xf32>
    %263 = arith.addf %258, %262 : vector<8x32xf32>
    %264 = math.tanh %263 : vector<8x32xf32>
    %cst_58 = arith.constant 1.000000e+00 : f32
    %265 = vector.broadcast %cst_58 : f32 to vector<8x32xf32>
    %266 = arith.subf %265, %257 : vector<8x32xf32>
    %267 = arith.mulf %266, %264 : vector<8x32xf32>
    %268 = arith.mulf %257, %237 : vector<8x32xf32>
    %269 = arith.addf %267, %268 : vector<8x32xf32>
    %270 = arith.addi %6, %c5_i32 : i32
    %271 = vector.broadcast %270 : i32 to vector<8x1xi32>
    %272 = arith.cmpi slt, %271, %3 : vector<8x1xi32>
    %cst_59 = arith.constant 0.000000e+00 : f32
    %273 = vector.shape_cast %272 : vector<8x1xi1> to vector<8x1xi1>
    %274 = vector.broadcast %273 : vector<8x1xi1> to vector<8x32xi1>
    %275 = vector.broadcast %cst_59 : f32 to vector<8x32xf32>
    %276 = arith.select %274, %269, %275 : vector<8x32xi1>, vector<8x32xf32>
    %277 = arith.index_cast %c5_i32 : i32 to index
    %c0_60 = arith.constant 0 : index
    %c0_61 = arith.constant 0 : index
    %278 = vector.load %arg5[%277, %c0_60, %c0_61] : memref<8x8x32xf32, #tpu.memory_space<vmem>>, vector<1x8x32xf32>
    %279 = vector.shape_cast %278 : vector<1x8x32xf32> to vector<8x32xf32>
    %280 = vector.shape_cast %276 : vector<8x32xf32> to vector<1x8x32xf32>
    tpu.vector_store %arg5[%277, %c0_60, %c0_61], %280 {strides = array<i32>} : memref<8x8x32xf32, #tpu.memory_space<vmem>>, vector<1x8x32xf32>,
    %281 = vector.shape_cast %272 : vector<8x1xi1> to vector<8x1xi1>
    %282 = vector.broadcast %281 : vector<8x1xi1> to vector<8x32xi1>
    %283 = arith.select %282, %269, %237 : vector<8x32xi1>, vector<8x32xf32>
    %c6_i32 = arith.constant 6 : i32
    %284 = arith.index_cast %c6_i32 : i32 to index
    %c0_62 = arith.constant 0 : index
    %c0_63 = arith.constant 0 : index
    %285 = vector.load %arg1[%284, %c0_62, %c0_63] : memref<8x8x96xf32, #tpu.memory_space<vmem>>, vector<1x8x96xf32>
    %286 = vector.shape_cast %285 : vector<1x8x96xf32> to vector<8x96xf32>
    %cst_64 = arith.constant dense<0.000000e+00> : vector<8x96xf32>
    %287 = tpu.matmul %283, %4, %cst_64 {dimension_numbers = #tpu.dot_dimension_numbers<[1], [0], [0], [1], [0, 0, 1, 1], [], []>} : vector<8x32xf32>, vector<32x96xf32>, vector<8x96xf32> -> vector<8x96xf32>
    %288 = vector.extract_strided_slice %286 {offsets = [0, 0], sizes = [8, 32], strides = [1, 1]} : vector<8x96xf32> to vector<8x32xf32>
    %289 = vector.extract_strided_slice %287 {offsets = [0, 0], sizes = [8, 32], strides = [1, 1]} : vector<8x96xf32> to vector<8x32xf32>
    %290 = arith.addf %288, %289 : vector<8x32xf32>
    %291 = arith.negf %290 : vector<8x32xf32>
    %292 = math.exp %291 : vector<8x32xf32>
    %cst_65 = arith.constant 1.000000e+00 : f32
    %293 = vector.broadcast %cst_65 : f32 to vector<8x32xf32>
    %294 = arith.addf %293, %292 : vector<8x32xf32>
    %295 = arith.divf %293, %294 : vector<8x32xf32>
    %296 = vector.extract_strided_slice %286 {offsets = [0, 32], sizes = [8, 32], strides = [1, 1]} : vector<8x96xf32> to vector<8x32xf32>
    %297 = vector.extract_strided_slice %287 {offsets = [0, 32], sizes = [8, 32], strides = [1, 1]} : vector<8x96xf32> to vector<8x32xf32>
    %298 = arith.addf %296, %297 : vector<8x32xf32>
    %299 = arith.negf %298 : vector<8x32xf32>
    %300 = math.exp %299 : vector<8x32xf32>
    %cst_66 = arith.constant 1.000000e+00 : f32
    %301 = vector.broadcast %cst_66 : f32 to vector<8x32xf32>
    %302 = arith.addf %301, %300 : vector<8x32xf32>
    %303 = arith.divf %301, %302 : vector<8x32xf32>
    %304 = vector.extract_strided_slice %286 {offsets = [0, 64], sizes = [8, 32], strides = [1, 1]} : vector<8x96xf32> to vector<8x32xf32>
    %305 = vector.extract_strided_slice %287 {offsets = [0, 64], sizes = [8, 32], strides = [1, 1]} : vector<8x96xf32> to vector<8x32xf32>
    %306 = vector.broadcast %5 : vector<1x32xf32> to vector<8x32xf32>
    %307 = arith.addf %305, %306 : vector<8x32xf32>
    %308 = arith.mulf %295, %307 : vector<8x32xf32>
    %309 = arith.addf %304, %308 : vector<8x32xf32>
    %310 = math.tanh %309 : vector<8x32xf32>
    %cst_67 = arith.constant 1.000000e+00 : f32
    %311 = vector.broadcast %cst_67 : f32 to vector<8x32xf32>
    %312 = arith.subf %311, %303 : vector<8x32xf32>
    %313 = arith.mulf %312, %310 : vector<8x32xf32>
    %314 = arith.mulf %303, %283 : vector<8x32xf32>
    %315 = arith.addf %313, %314 : vector<8x32xf32>
    %316 = arith.addi %6, %c6_i32 : i32
    %317 = vector.broadcast %316 : i32 to vector<8x1xi32>
    %318 = arith.cmpi slt, %317, %3 : vector<8x1xi32>
    %cst_68 = arith.constant 0.000000e+00 : f32
    %319 = vector.shape_cast %318 : vector<8x1xi1> to vector<8x1xi1>
    %320 = vector.broadcast %319 : vector<8x1xi1> to vector<8x32xi1>
    %321 = vector.broadcast %cst_68 : f32 to vector<8x32xf32>
    %322 = arith.select %320, %315, %321 : vector<8x32xi1>, vector<8x32xf32>
    %323 = arith.index_cast %c6_i32 : i32 to index
    %c0_69 = arith.constant 0 : index
    %c0_70 = arith.constant 0 : index
    %324 = vector.load %arg5[%323, %c0_69, %c0_70] : memref<8x8x32xf32, #tpu.memory_space<vmem>>, vector<1x8x32xf32>
    %325 = vector.shape_cast %324 : vector<1x8x32xf32> to vector<8x32xf32>
    %326 = vector.shape_cast %322 : vector<8x32xf32> to vector<1x8x32xf32>
    tpu.vector_store %arg5[%323, %c0_69, %c0_70], %326 {strides = array<i32>} : memref<8x8x32xf32, #tpu.memory_space<vmem>>, vector<1x8x32xf32>,
    %327 = vector.shape_cast %318 : vector<8x1xi1> to vector<8x1xi1>
    %328 = vector.broadcast %327 : vector<8x1xi1> to vector<8x32xi1>
    %329 = arith.select %328, %315, %283 : vector<8x32xi1>, vector<8x32xf32>
    %c7_i32 = arith.constant 7 : i32
    %330 = arith.index_cast %c7_i32 : i32 to index
    %c0_71 = arith.constant 0 : index
    %c0_72 = arith.constant 0 : index
    %331 = vector.load %arg1[%330, %c0_71, %c0_72] : memref<8x8x96xf32, #tpu.memory_space<vmem>>, vector<1x8x96xf32>
    %332 = vector.shape_cast %331 : vector<1x8x96xf32> to vector<8x96xf32>
    %cst_73 = arith.constant dense<0.000000e+00> : vector<8x96xf32>
    %333 = tpu.matmul %329, %4, %cst_73 {dimension_numbers = #tpu.dot_dimension_numbers<[1], [0], [0], [1], [0, 0, 1, 1], [], []>} : vector<8x32xf32>, vector<32x96xf32>, vector<8x96xf32> -> vector<8x96xf32>
    %334 = vector.extract_strided_slice %332 {offsets = [0, 0], sizes = [8, 32], strides = [1, 1]} : vector<8x96xf32> to vector<8x32xf32>
    %335 = vector.extract_strided_slice %333 {offsets = [0, 0], sizes = [8, 32], strides = [1, 1]} : vector<8x96xf32> to vector<8x32xf32>
    %336 = arith.addf %334, %335 : vector<8x32xf32>
    %337 = arith.negf %336 : vector<8x32xf32>
    %338 = math.exp %337 : vector<8x32xf32>
    %cst_74 = arith.constant 1.000000e+00 : f32
    %339 = vector.broadcast %cst_74 : f32 to vector<8x32xf32>
    %340 = arith.addf %339, %338 : vector<8x32xf32>
    %341 = arith.divf %339, %340 : vector<8x32xf32>
    %342 = vector.extract_strided_slice %332 {offsets = [0, 32], sizes = [8, 32], strides = [1, 1]} : vector<8x96xf32> to vector<8x32xf32>
    %343 = vector.extract_strided_slice %333 {offsets = [0, 32], sizes = [8, 32], strides = [1, 1]} : vector<8x96xf32> to vector<8x32xf32>
    %344 = arith.addf %342, %343 : vector<8x32xf32>
    %345 = arith.negf %344 : vector<8x32xf32>
    %346 = math.exp %345 : vector<8x32xf32>
    %cst_75 = arith.constant 1.000000e+00 : f32
    %347 = vector.broadcast %cst_75 : f32 to vector<8x32xf32>
    %348 = arith.addf %347, %346 : vector<8x32xf32>
    %349 = arith.divf %347, %348 : vector<8x32xf32>
    %350 = vector.extract_strided_slice %332 {offsets = [0, 64], sizes = [8, 32], strides = [1, 1]} : vector<8x96xf32> to vector<8x32xf32>
    %351 = vector.extract_strided_slice %333 {offsets = [0, 64], sizes = [8, 32], strides = [1, 1]} : vector<8x96xf32> to vector<8x32xf32>
    %352 = vector.broadcast %5 : vector<1x32xf32> to vector<8x32xf32>
    %353 = arith.addf %351, %352 : vector<8x32xf32>
    %354 = arith.mulf %341, %353 : vector<8x32xf32>
    %355 = arith.addf %350, %354 : vector<8x32xf32>
    %356 = math.tanh %355 : vector<8x32xf32>
    %cst_76 = arith.constant 1.000000e+00 : f32
    %357 = vector.broadcast %cst_76 : f32 to vector<8x32xf32>
    %358 = arith.subf %357, %349 : vector<8x32xf32>
    %359 = arith.mulf %358, %356 : vector<8x32xf32>
    %360 = arith.mulf %349, %329 : vector<8x32xf32>
    %361 = arith.addf %359, %360 : vector<8x32xf32>
    %362 = arith.addi %6, %c7_i32 : i32
    %363 = vector.broadcast %362 : i32 to vector<8x1xi32>
    %364 = arith.cmpi slt, %363, %3 : vector<8x1xi32>
    %cst_77 = arith.constant 0.000000e+00 : f32
    %365 = vector.shape_cast %364 : vector<8x1xi1> to vector<8x1xi1>
    %366 = vector.broadcast %365 : vector<8x1xi1> to vector<8x32xi1>
    %367 = vector.broadcast %cst_77 : f32 to vector<8x32xf32>
    %368 = arith.select %366, %361, %367 : vector<8x32xi1>, vector<8x32xf32>
    %369 = arith.index_cast %c7_i32 : i32 to index
    %c0_78 = arith.constant 0 : index
    %c0_79 = arith.constant 0 : index
    %370 = vector.load %arg5[%369, %c0_78, %c0_79] : memref<8x8x32xf32, #tpu.memory_space<vmem>>, vector<1x8x32xf32>
    %371 = vector.shape_cast %370 : vector<1x8x32xf32> to vector<8x32xf32>
    %372 = vector.shape_cast %368 : vector<8x32xf32> to vector<1x8x32xf32>
    tpu.vector_store %arg5[%369, %c0_78, %c0_79], %372 {strides = array<i32>} : memref<8x8x32xf32, #tpu.memory_space<vmem>>, vector<1x8x32xf32>,
    %373 = vector.shape_cast %364 : vector<8x1xi1> to vector<8x1xi1>
    %374 = vector.broadcast %373 : vector<8x1xi1> to vector<8x32xi1>
    %375 = arith.select %374, %361, %329 : vector<8x32xi1>, vector<8x32xf32>
    %c8_i32_80 = arith.constant 8 : i32
    %c0_81 = arith.constant 0 : index
    %c0_82 = arith.constant 0 : index
    %376 = vector.load %arg7[%c0_81, %c0_82] : memref<8x32xf32, #tpu.memory_space<vmem>>, vector<8x32xf32>
    tpu.vector_store %arg7[%c0_81, %c0_82], %375 {strides = array<i32>} : memref<8x32xf32, #tpu.memory_space<vmem>>, vector<8x32xf32>,
    %c0_i32_83 = arith.constant 0 : i32
    %377 = arith.cmpi eq, %arg0, %c0_i32_83 : i32
    %378 = arith.extui %377 : i1 to i32
    %c0_i32_84 = arith.constant 0 : i32
    %379 = arith.cmpi ne, %378, %c0_i32_84 : i32
    scf.if %379 {
      %c0_85 = arith.constant 0 : index
      %c0_86 = arith.constant 0 : index
      %c0_87 = arith.constant 0 : index
      %380 = vector.load %arg6[%c0_85, %c0_86, %c0_87] : memref<1x8x32xf32, #tpu.memory_space<vmem>>, vector<1x8x32xf32>
      %381 = vector.shape_cast %380 : vector<1x8x32xf32> to vector<8x32xf32>
      %382 = vector.shape_cast %375 : vector<8x32xf32> to vector<1x8x32xf32>
      tpu.vector_store %arg6[%c0_85, %c0_86, %c0_87], %382 {strides = array<i32>} : memref<1x8x32xf32, #tpu.memory_space<vmem>>, vector<1x8x32xf32>,
    } else {
    }
    return
  }
  func.func @transform_0(%arg0: i32) -> (i32, i32, i32) {
    %c0_i32 = arith.constant 0 : i32
    %c0_i32_0 = arith.constant 0 : i32
    %c0_i32_1 = arith.constant 0 : i32
    return %arg0, %c0_i32, %c0_i32_0 : i32, i32, i32
  }
  func.func @transform_1(%arg0: i32) -> (i32, i32) {
    %c0_i32 = arith.constant 0 : i32
    %c0_i32_0 = arith.constant 0 : i32
    %c0_i32_1 = arith.constant 0 : i32
    return %c0_i32, %c0_i32_0 : i32, i32
  }
  func.func @transform_2(%arg0: i32) -> (i32, i32) {
    %c0_i32 = arith.constant 0 : i32
    %c0_i32_0 = arith.constant 0 : i32
    %c0_i32_1 = arith.constant 0 : i32
    return %c0_i32, %c0_i32_0 : i32, i32
  }
  func.func @transform_3(%arg0: i32) -> (i32, i32) {
    %c0_i32 = arith.constant 0 : i32
    %c0_i32_0 = arith.constant 0 : i32
    %c0_i32_1 = arith.constant 0 : i32
    return %c0_i32, %c0_i32_0 : i32, i32
  }
  func.func @transform_4(%arg0: i32) -> (i32, i32, i32) {
    %c0_i32 = arith.constant 0 : i32
    %c0_i32_0 = arith.constant 0 : i32
    %c0_i32_1 = arith.constant 0 : i32
    return %arg0, %c0_i32, %c0_i32_0 : i32, i32, i32
  }
  func.func @transform_5(%arg0: i32) -> (i32, i32, i32) {
    %c0_i32 = arith.constant 0 : i32
    %c0_i32_0 = arith.constant 0 : i32
    %c0_i32_1 = arith.constant 0 : i32
    %c0_i32_2 = arith.constant 0 : i32
    return %c0_i32, %c0_i32_0, %c0_i32_1 : i32, i32, i32
  }
}

</mosaic_0001>

<llo_original>
// kernel: encoder_forward.1
$region0: #{encoder_forward.1}
  #allocation0 [shape = 'u32[]', space=smem, size = 0x4, offset = 0x4, fixed_abs, tag = 'smem constant byte address 0x4 - core index']
  #allocation1 [shape = 'u32[144,128]{1,0:T(1,128)}', space=vmem, size = 0x12000, scoped, tag = 'internal scratch']
  #allocation2 [shape = 'f32[8,32]{1,0:T(8,128)}', space=vmem, size = 0x1000, scoped, tag = 'scratch operand']
  %s0 = inlined_call_operand.vmem [shape: f32[8,8,96], index: 0, kind: input, shape index: {}]
  %s1 = inlined_call_operand.vmem [shape: s32[8,1], index: 1, kind: input, shape index: {}]
  %s2 = inlined_call_operand.vmem [shape: f32[32,96], index: 2, kind: input, shape index: {}]
  %s3 = inlined_call_operand.vmem [shape: f32[1,32], index: 3, kind: input, shape index: {}]
  %s4 = inlined_call_operand.vmem [shape: f32[8,8,32], index: 4, kind: output, shape index: {0}]
  %s5 = inlined_call_operand.vmem [shape: f32[1,8,32], index: 5, kind: output, shape index: {1}]
  %6 = xla_tuple %s4, %s5
  %s7 = sld [smem:[#allocation0]]
  $region42: #{encoder_forward.1} parent=0
    _
  %s9 = ssub.s32 1, %s7
  %s10 = scalar_select 0, %s9, %s7
  // Predicated region
  $region2: #{encoder_forward.1} parent=0 // pred_check
    _
  $region3: #{encoder_forward.1} parent=0 // pred_check_branch
    %12 = sbr.rel (0) target = $region5
  $region4: #{encoder_forward.1} parent=0 // pred_region
    _
  $region5: #{encoder_forward.1} parent=0 // pred_fallthru
    _
  // Predicated region
  $region6: #{encoder_forward.1} parent=0 // pred_check
    _
  $region7: #{encoder_forward.1} parent=0 // pred_check_branch
    %14 = sbr.rel (0) target = $region9
  $region8: #{encoder_forward.1} parent=0 // pred_region
    _
  $region9: #{encoder_forward.1} parent=0 // pred_fallthru
    _
  // Predicated region
  $region10: #{encoder_forward.1} parent=0 // pred_check
    _
  $region11: #{encoder_forward.1} parent=0 // pred_check_branch
    %16 = sbr.rel (0) target = $region13
  $region12: #{encoder_forward.1} parent=0 // pred_region
    _
  $region13: #{encoder_forward.1} parent=0 // pred_fallthru
    _
  // Predicated region
  $region14: #{encoder_forward.1} parent=0 // pred_check
    _
  $region15: #{encoder_forward.1} parent=0 // pred_check_branch
    %18 = sbr.rel (0) target = $region17
  $region16: #{encoder_forward.1} parent=0 // pred_region
    _
  $region17: #{encoder_forward.1} parent=0 // pred_fallthru
    _
  %p19 = scmp.eq.s32.totalorder 0, 0
  // Predicated region
  $region18: #{encoder_forward.1} parent=0 // pred_check
    %p20 = pneg %p19
  $region19: #{encoder_forward.1} parent=0 // pred_check_branch
    %22 = sbr.rel (%p20) target = $region21
  $region20: #{encoder_forward.1} parent=0 // pred_region
    %vm23 = vcmask 261120
    %24 = vst.msk [vmem:[#allocation2] sm:$0xff] %vm23, 0.0
  $region21: #{encoder_forward.1} parent=0 // pred_fallthru
    _
  %v25 = vld [vmem:[%s1] sm:$0xff]
  %v26 = vld [vmem:[%s2] sm:$0xff]
  %v27 = vld [vmem:[%s2 + $0x8] sm:$0xff]
  %v28 = vld [vmem:[%s2 + $0x10] sm:$0xff]
  %v29 = vld [vmem:[%s2 + $0x18] sm:$0xff]
  %v30 = vld [vmem:[%s3] sm:$0x1]
  %s31 = smul.u32 0, 8
  %v32 = vld [vmem:[#allocation2] sm:$0xff]
  %v33 = vld [vmem:[%s0] sm:$0xff]
  %vm34 = vcmask 261120
  %v36 = vsel %vm34, %v32, 0
  %38 = vmatprep.subr.mxu0 0.0
  %39 = vmatpush1.msra.mxu0 %v26
  %40 = vmatprep.subr.mxu0 0.0
  %41 = vmatpush1.msra.mxu0 %v27
  %42 = vmatprep.subr.mxu0 0.0
  %43 = vmatpush1.msra.mxu0 %v28
  %44 = vmatprep.subr.mxu0 0.0
  %45 = vmatpush1.msra.mxu0 %v29
  %46 = vmatprep.subr.mxu0 0.0
  %47 = vmatpush1.msra.mxu0 0.0
  %48 = vmatprep.subr.mxu0 0.0
  %49 = vmatpush1.msra.mxu0 0.0
  %50 = vmatprep.subr.mxu0 0.0
  %51 = vmatpush1.msra.mxu0 0.0
  %52 = vmatprep.subr.mxu0 0.0
  %53 = vmatpush1.msra.mxu0 0.0
  %54 = vmatprep.subr.mxu0 0.0
  %55 = vmatpush1.msra.mxu0 0.0
  %56 = vmatprep.subr.mxu0 0.0
  %57 = vmatpush1.msra.mxu0 0.0
  %58 = vmatprep.subr.mxu0 0.0
  %59 = vmatpush1.msra.mxu0 0.0
  %60 = vmatprep.subr.mxu0 0.0
  %61 = vmatpush1.msra.mxu0 0.0
  %62 = vmatprep.subr.mxu0 0.0
  %63 = vmatpush1.msra.mxu0 0.0
  %64 = vmatprep.subr.mxu0 0.0
  %65 = vmatpush1.msra.mxu0 0.0
  %66 = vmatprep.subr.mxu0 0.0
  %67 = vmatpush1.msra.mxu0 0.0
  %68 = vmatprep.subr.mxu0 0.0
  %69 = vmatpush1.msra.mxu0 0.0
  %70 = vmatprep.subr.mxu0 0.0
  %71 = vmatpush1.msra.mxu0 0.0
  %72 = vmatprep.subr.mxu0 0.0
  %73 = vmatpush1.msra.mxu0 0.0
  %74 = vmatprep.subr.mxu0 0.0
  %75 = vmatpush1.msra.mxu0 0.0
  %76 = vmatprep.subr.mxu0 0.0
  %77 = vmatpush1.msra.mxu0 0.0
  %78 = vmatprep.subr.mxu0 0.0
  %79 = vmatpush1.msra.mxu0 0.0
  %80 = vmatprep.subr.mxu0 0.0
  %81 = vmatpush1.msra.mxu0 0.0
  %82 = vmatprep.subr.mxu0 0.0
  %83 = vmatpush1.msra.mxu0 0.0
  %84 = vmatprep.subr.mxu0 0.0
  %85 = vmatpush1.msra.mxu0 0.0
  %86 = vmatprep.subr.mxu0 0.0
  %87 = vmatpush1.msra.mxu0 0.0
  %88 = vmatprep.subr.mxu0 0.0
  %89 = vmatpush1.msra.mxu0 0.0
  %90 = vmatprep.subr.mxu0 0.0
  %91 = vmatpush1.msra.mxu0 0.0
  %92 = vmatprep.subr.mxu0 0.0
  %93 = vmatpush1.msra.mxu0 0.0
  %94 = vmatprep.subr.mxu0 0.0
  %95 = vmatpush1.msra.mxu0 0.0
  %96 = vmatprep.subr.mxu0 0.0
  %97 = vmatpush1.msra.mxu0 0.0
  %98 = vmatprep.subr.mxu0 0.0
  %99 = vmatpush1.msra.mxu0 0.0
  %100 = vmatprep.subr.mxu0 0.0
  %101 = vmatpush1.msra.mxu0 0.0
  %102 = vmatprep.mubr.f32.mxu0 0.0
  %103 = vmatmul.mubr.f32.gmra.mrb[0].mxu0 %v36
  %v104 = vpop.f32.mrb[0].mxu0
  %v105 = vadd.f32 0.0, %v104
  %v106 = vpop.f32.mrb[0].mxu0
  %107 = vdwg.mxu0
  %v108 = vadd.f32 %v33, %v105
  %v109 = vxor.u32 %v108, 2147483648
  %v110 = vmul.f32 %v109, 1.442695
  %v111 = vpow.pop %v110
  %v112 = vadd.f32 %v111, 1.0
  %v113 = vrcp.pop %v112
  %v114 = vmul.f32 1.0, %v113
  %v116 = vlaneseq
  %v117 = vshrl.u32 %v116, 7
  %v118 = vsub.s32 0, %v117
  %v119 = vrot.slane %v30, %v118
  %120 = vrot.lane.b32.xlu0 %v119, 64
  %v121 = vpop.permute.xlu0 %120
  %v123 = vadd.f32 %v105, %v121
  %125 = vrot.lane.b32.xlu0 %v123, 64
  %v126 = vpop.permute.xlu0 %125
  %v128 = vmul.f32 %v114, %v126
  %130 = vrot.lane.b32.xlu0 %v128, 64
  %v131 = vpop.permute.xlu0 %130
  %v133 = vadd.f32 %v33, %v131
  %v134 = vtanh.pop %v133
  %v135 = vsub.f32 1.0, %v114
  %137 = vrot.lane.b32.xlu0 %v134, 96
  %v138 = vpop.permute.xlu0 %137
  %v140 = vmul.f32 %v135, %v138
  %141 = vrot.lane.b32.xlu0 %v32, 32
  %v142 = vpop.permute.xlu0 %141
  %v144 = vmul.f32 %v114, %v142
  %v145 = vadd.f32 %v140, %v144
  %v146 = vstv %s31
  %vm147 = vcmp.lt.s32.totalorder %v146, %v25
  %v148 = vsel %vm147, 1, 0
  %149 = vset.pattern.permute.xlu0 0
  %150 = vperm.xlu0 %149, %v148
  %v151 = vpop.permute.xlu0 %150
  %vm152 = vcmp.eq.s32.totalorder %v151, 1
  %v153 = vsel %vm152, %v145, 0.0
  %155 = vrot.lane.b32.xlu0 %v153, 96
  %v156 = vpop.permute.xlu0 %155
  %158 = vst.msk [vmem:[%s4] sm:$0xff] %vm34, %v156
  %v159 = vsel %vm152, %v145, %v142
  %s160 = scalar_lea.vmem %s0, 8
  %v161 = vld [vmem:[%s160] sm:$0xff]
  %163 = vrot.lane.b32.xlu0 %v159, 96
  %v164 = vpop.permute.xlu0 %163
  %v165 = vsel %vm34, %v164, 0
  %167 = vmatprep.subr.mxu0 0.0
  %168 = vmatpush1.msra.mxu0 %v26
  %169 = vmatprep.subr.mxu0 0.0
  %170 = vmatpush1.msra.mxu0 %v27
  %171 = vmatprep.subr.mxu0 0.0
  %172 = vmatpush1.msra.mxu0 %v28
  %173 = vmatprep.subr.mxu0 0.0
  %174 = vmatpush1.msra.mxu0 %v29
  %175 = vmatprep.subr.mxu0 0.0
  %176 = vmatpush1.msra.mxu0 0.0
  %177 = vmatprep.subr.mxu0 0.0
  %178 = vmatpush1.msra.mxu0 0.0
  %179 = vmatprep.subr.mxu0 0.0
  %180 = vmatpush1.msra.mxu0 0.0
  %181 = vmatprep.subr.mxu0 0.0
  %182 = vmatpush1.msra.mxu0 0.0
  %183 = vmatprep.subr.mxu0 0.0
  %184 = vmatpush1.msra.mxu0 0.0
  %185 = vmatprep.subr.mxu0 0.0
  %186 = vmatpush1.msra.mxu0 0.0
  %187 = vmatprep.subr.mxu0 0.0
  %188 = vmatpush1.msra.mxu0 0.0
  %189 = vmatprep.subr.mxu0 0.0
  %190 = vmatpush1.msra.mxu0 0.0
  %191 = vmatprep.subr.mxu0 0.0
  %192 = vmatpush1.msra.mxu0 0.0
  %193 = vmatprep.subr.mxu0 0.0
  %194 = vmatpush1.msra.mxu0 0.0
  %195 = vmatprep.subr.mxu0 0.0
  %196 = vmatpush1.msra.mxu0 0.0
  %197 = vmatprep.subr.mxu0 0.0
  %198 = vmatpush1.msra.mxu0 0.0
  %199 = vmatprep.subr.mxu0 0.0
  %200 = vmatpush1.msra.mxu0 0.0
  %201 = vmatprep.subr.mxu0 0.0
  %202 = vmatpush1.msra.mxu0 0.0
  %203 = vmatprep.subr.mxu0 0.0
  %204 = vmatpush1.msra.mxu0 0.0
  %205 = vmatprep.subr.mxu0 0.0
  %206 = vmatpush1.msra.mxu0 0.0
  %207 = vmatprep.subr.mxu0 0.0
  %208 = vmatpush1.msra.mxu0 0.0
  %209 = vmatprep.subr.mxu0 0.0
  %210 = vmatpush1.msra.mxu0 0.0
  %211 = vmatprep.subr.mxu0 0.0
  %212 = vmatpush1.msra.mxu0 0.0
  %213 = vmatprep.subr.mxu0 0.0
  %214 = vmatpush1.msra.mxu0 0.0
  %215 = vmatprep.subr.mxu0 0.0
  %216 = vmatpush1.msra.mxu0 0.0
  %217 = vmatprep.subr.mxu0 0.0
  %218 = vmatpush1.msra.mxu0 0.0
  %219 = vmatprep.subr.mxu0 0.0
  %220 = vmatpush1.msra.mxu0 0.0
  %221 = vmatprep.subr.mxu0 0.0
  %222 = vmatpush1.msra.mxu0 0.0
  %223 = vmatprep.subr.mxu0 0.0
  %224 = vmatpush1.msra.mxu0 0.0
  %225 = vmatprep.subr.mxu0 0.0
  %226 = vmatpush1.msra.mxu0 0.0
  %227 = vmatprep.subr.mxu0 0.0
  %228 = vmatpush1.msra.mxu0 0.0
  %229 = vmatprep.subr.mxu0 0.0
  %230 = vmatpush1.msra.mxu0 0.0
  %231 = vmatprep.mubr.f32.mxu0 0.0
  %232 = vmatmul.mubr.f32.gmra.mrb[0].mxu0 %v165
  %v233 = vpop.f32.mrb[0].mxu0
  %v234 = vadd.f32 0.0, %v233
  %v235 = vpop.f32.mrb[0].mxu0
  %236 = vdwg.mxu0
  %v237 = vadd.f32 %v161, %v234
  %v238 = vxor.u32 %v237, 2147483648
  %v239 = vmul.f32 %v238, 1.442695
  %v240 = vpow.pop %v239
  %v241 = vadd.f32 %v240, 1.0
  %v242 = vrcp.pop %v241
  %v243 = vmul.f32 1.0, %v242
  %v244 = vadd.f32 %v234, %v121
  %246 = vrot.lane.b32.xlu0 %v244, 64
  %v247 = vpop.permute.xlu0 %246
  %v249 = vmul.f32 %v243, %v247
  %251 = vrot.lane.b32.xlu0 %v249, 64
  %v252 = vpop.permute.xlu0 %251
  %v254 = vadd.f32 %v161, %v252
  %v255 = vtanh.pop %v254
  %v256 = vsub.f32 1.0, %v243
  %258 = vrot.lane.b32.xlu0 %v255, 96
  %v259 = vpop.permute.xlu0 %258
  %v261 = vmul.f32 %v256, %v259
  %v262 = vmul.f32 %v243, %v159
  %v263 = vadd.f32 %v261, %v262
  %s264 = sadd.s32 %s31, 1
  %v265 = vstv %s264
  %vm266 = vcmp.lt.s32.totalorder %v265, %v25
  %v267 = vsel %vm266, 1, 0
  %268 = vset.pattern.permute.xlu0 0
  %269 = vperm.xlu0 %268, %v267
  %v270 = vpop.permute.xlu0 %269
  %vm271 = vcmp.eq.s32.totalorder %v270, 1
  %v272 = vsel %vm271, %v263, 0.0
  %274 = vrot.lane.b32.xlu0 %v272, 96
  %v275 = vpop.permute.xlu0 %274
  %s277 = scalar_lea.vmem %s4, 8
  %278 = vst.msk [vmem:[%s277] sm:$0xff] %vm34, %v275
  %v279 = vsel %vm271, %v263, %v159
  %s280 = scalar_lea.vmem %s0, 16
  %v281 = vld [vmem:[%s280] sm:$0xff]
  %283 = vrot.lane.b32.xlu0 %v279, 96
  %v284 = vpop.permute.xlu0 %283
  %v285 = vsel %vm34, %v284, 0
  %287 = vmatprep.subr.mxu0 0.0
  %288 = vmatpush1.msra.mxu0 %v26
  %289 = vmatprep.subr.mxu0 0.0
  %290 = vmatpush1.msra.mxu0 %v27
  %291 = vmatprep.subr.mxu0 0.0
  %292 = vmatpush1.msra.mxu0 %v28
  %293 = vmatprep.subr.mxu0 0.0
  %294 = vmatpush1.msra.mxu0 %v29
  %295 = vmatprep.subr.mxu0 0.0
  %296 = vmatpush1.msra.mxu0 0.0
  %297 = vmatprep.subr.mxu0 0.0
  %298 = vmatpush1.msra.mxu0 0.0
  %299 = vmatprep.subr.mxu0 0.0
  %300 = vmatpush1.msra.mxu0 0.0
  %301 = vmatprep.subr.mxu0 0.0
  %302 = vmatpush1.msra.mxu0 0.0
  %303 = vmatprep.subr.mxu0 0.0
  %304 = vmatpush1.msra.mxu0 0.0
  %305 = vmatprep.subr.mxu0 0.0
  %306 = vmatpush1.msra.mxu0 0.0
  %307 = vmatprep.subr.mxu0 0.0
  %308 = vmatpush1.msra.mxu0 0.0
  %309 = vmatprep.subr.mxu0 0.0
  %310 = vmatpush1.msra.mxu0 0.0
  %311 = vmatprep.subr.mxu0 0.0
  %312 = vmatpush1.msra.mxu0 0.0
  %313 = vmatprep.subr.mxu0 0.0
  %314 = vmatpush1.msra.mxu0 0.0
  %315 = vmatprep.subr.mxu0 0.0
  %316 = vmatpush1.msra.mxu0 0.0
  %317 = vmatprep.subr.mxu0 0.0
  %318 = vmatpush1.msra.mxu0 0.0
  %319 = vmatprep.subr.mxu0 0.0
  %320 = vmatpush1.msra.mxu0 0.0
  %321 = vmatprep.subr.mxu0 0.0
  %322 = vmatpush1.msra.mxu0 0.0
  %323 = vmatprep.subr.mxu0 0.0
  %324 = vmatpush1.msra.mxu0 0.0
  %325 = vmatprep.subr.mxu0 0.0
  %326 = vmatpush1.msra.mxu0 0.0
  %327 = vmatprep.subr.mxu0 0.0
  %328 = vmatpush1.msra.mxu0 0.0
  %329 = vmatprep.subr.mxu0 0.0
  %330 = vmatpush1.msra.mxu0 0.0
  %331 = vmatprep.subr.mxu0 0.0
  %332 = vmatpush1.msra.mxu0 0.0
  %333 = vmatprep.subr.mxu0 0.0
  %334 = vmatpush1.msra.mxu0 0.0
  %335 = vmatprep.subr.mxu0 0.0
  %336 = vmatpush1.msra.mxu0 0.0
  %337 = vmatprep.subr.mxu0 0.0
  %338 = vmatpush1.msra.mxu0 0.0
  %339 = vmatprep.subr.mxu0 0.0
  %340 = vmatpush1.msra.mxu0 0.0
  %341 = vmatprep.subr.mxu0 0.0
  %342 = vmatpush1.msra.mxu0 0.0
  %343 = vmatprep.subr.mxu0 0.0
  %344 = vmatpush1.msra.mxu0 0.0
  %345 = vmatprep.subr.mxu0 0.0
  %346 = vmatpush1.msra.mxu0 0.0
  %347 = vmatprep.subr.mxu0 0.0
  %348 = vmatpush1.msra.mxu0 0.0
  %349 = vmatprep.subr.mxu0 0.0
  %350 = vmatpush1.msra.mxu0 0.0
  %351 = vmatprep.mubr.f32.mxu0 0.0
  %352 = vmatmul.mubr.f32.gmra.mrb[0].mxu0 %v285
  %v353 = vpop.f32.mrb[0].mxu0
  %v354 = vadd.f32 0.0, %v353
  %v355 = vpop.f32.mrb[0].mxu0
  %356 = vdwg.mxu0
  %v357 = vadd.f32 %v281, %v354
  %v358 = vxor.u32 %v357, 2147483648
  %v359 = vmul.f32 %v358, 1.442695
  %v360 = vpow.pop %v359
  %v361 = vadd.f32 %v360, 1.0
  %v362 = vrcp.pop %v361
  %v363 = vmul.f32 1.0, %v362
  %v364 = vadd.f32 %v354, %v121
  %366 = vrot.lane.b32.xlu0 %v364, 64
  %v367 = vpop.permute.xlu0 %366
  %v369 = vmul.f32 %v363, %v367
  %371 = vrot.lane.b32.xlu0 %v369, 64
  %v372 = vpop.permute.xlu0 %371
  %v374 = vadd.f32 %v281, %v372
  %v375 = vtanh.pop %v374
  %v376 = vsub.f32 1.0, %v363
  %378 = vrot.lane.b32.xlu0 %v375, 96
  %v379 = vpop.permute.xlu0 %378
  %v381 = vmul.f32 %v376, %v379
  %v382 = vmul.f32 %v363, %v279
  %v383 = vadd.f32 %v381, %v382
  %s384 = sadd.s32 %s31, 2
  %v385 = vstv %s384
  %vm386 = vcmp.lt.s32.totalorder %v385, %v25
  %v387 = vsel %vm386, 1, 0
  %388 = vset.pattern.permute.xlu0 0
  %389 = vperm.xlu0 %388, %v387
  %v390 = vpop.permute.xlu0 %389
  %vm391 = vcmp.eq.s32.totalorder %v390, 1
  %v392 = vsel %vm391, %v383, 0.0
  %394 = vrot.lane.b32.xlu0 %v392, 96
  %v395 = vpop.permute.xlu0 %394
  %s397 = scalar_lea.vmem %s4, 16
  %398 = vst.msk [vmem:[%s397] sm:$0xff] %vm34, %v395
  %v399 = vsel %vm391, %v383, %v279
  %s400 = scalar_lea.vmem %s0, 24
  %v401 = vld [vmem:[%s400] sm:$0xff]
  %403 = vrot.lane.b32.xlu0 %v399, 96
  %v404 = vpop.permute.xlu0 %403
  %v405 = vsel %vm34, %v404, 0
  %407 = vmatprep.subr.mxu0 0.0
  %408 = vmatpush1.msra.mxu0 %v26
  %409 = vmatprep.subr.mxu0 0.0
  %410 = vmatpush1.msra.mxu0 %v27
  %411 = vmatprep.subr.mxu0 0.0
  %412 = vmatpush1.msra.mxu0 %v28
  %413 = vmatprep.subr.mxu0 0.0
  %414 = vmatpush1.msra.mxu0 %v29
  %415 = vmatprep.subr.mxu0 0.0
  %416 = vmatpush1.msra.mxu0 0.0
  %417 = vmatprep.subr.mxu0 0.0
  %418 = vmatpush1.msra.mxu0 0.0
  %419 = vmatprep.subr.mxu0 0.0
  %420 = vmatpush1.msra.mxu0 0.0
  %421 = vmatprep.subr.mxu0 0.0
  %422 = vmatpush1.msra.mxu0 0.0
  %423 = vmatprep.subr.mxu0 0.0
  %424 = vmatpush1.msra.mxu0 0.0
  %425 = vmatprep.subr.mxu0 0.0
  %426 = vmatpush1.msra.mxu0 0.0
  %427 = vmatprep.subr.mxu0 0.0
  %428 = vmatpush1.msra.mxu0 0.0
  %429 = vmatprep.subr.mxu0 0.0
  %430 = vmatpush1.msra.mxu0 0.0
  %431 = vmatprep.subr.mxu0 0.0
  %432 = vmatpush1.msra.mxu0 0.0
  %433 = vmatprep.subr.mxu0 0.0
  %434 = vmatpush1.msra.mxu0 0.0
  %435 = vmatprep.subr.mxu0 0.0
  %436 = vmatpush1.msra.mxu0 0.0
  %437 = vmatprep.subr.mxu0 0.0
  %438 = vmatpush1.msra.mxu0 0.0
  %439 = vmatprep.subr.mxu0 0.0
  %440 = vmatpush1.msra.mxu0 0.0
  %441 = vmatprep.subr.mxu0 0.0
  %442 = vmatpush1.msra.mxu0 0.0
  %443 = vmatprep.subr.mxu0 0.0
  %444 = vmatpush1.msra.mxu0 0.0
  %445 = vmatprep.subr.mxu0 0.0
  %446 = vmatpush1.msra.mxu0 0.0
  %447 = vmatprep.subr.mxu0 0.0
  %448 = vmatpush1.msra.mxu0 0.0
  %449 = vmatprep.subr.mxu0 0.0
  %450 = vmatpush1.msra.mxu0 0.0
  %451 = vmatprep.subr.mxu0 0.0
  %452 = vmatpush1.msra.mxu0 0.0
  %453 = vmatprep.subr.mxu0 0.0
  %454 = vmatpush1.msra.mxu0 0.0
  %455 = vmatprep.subr.mxu0 0.0
  %456 = vmatpush1.msra.mxu0 0.0
  %457 = vmatprep.subr.mxu0 0.0
  %458 = vmatpush1.msra.mxu0 0.0
  %459 = vmatprep.subr.mxu0 0.0
  %460 = vmatpush1.msra.mxu0 0.0
  %461 = vmatprep.subr.mxu0 0.0
  %462 = vmatpush1.msra.mxu0 0.0
  %463 = vmatprep.subr.mxu0 0.0
  %464 = vmatpush1.msra.mxu0 0.0
  %465 = vmatprep.subr.mxu0 0.0
  %466 = vmatpush1.msra.mxu0 0.0
  %467 = vmatprep.subr.mxu0 0.0
  %468 = vmatpush1.msra.mxu0 0.0
  %469 = vmatprep.subr.mxu0 0.0
  %470 = vmatpush1.msra.mxu0 0.0
  %471 = vmatprep.mubr.f32.mxu0 0.0
  %472 = vmatmul.mubr.f32.gmra.mrb[0].mxu0 %v405
  %v473 = vpop.f32.mrb[0].mxu0
  %v474 = vadd.f32 0.0, %v473
  %v475 = vpop.f32.mrb[0].mxu0
  %476 = vdwg.mxu0
  %v477 = vadd.f32 %v401, %v474
  %v478 = vxor.u32 %v477, 2147483648
  %v479 = vmul.f32 %v478, 1.442695
  %v480 = vpow.pop %v479
  %v481 = vadd.f32 %v480, 1.0
  %v482 = vrcp.pop %v481
  %v483 = vmul.f32 1.0, %v482
  %v484 = vadd.f32 %v474, %v121
  %486 = vrot.lane.b32.xlu0 %v484, 64
  %v487 = vpop.permute.xlu0 %486
  %v489 = vmul.f32 %v483, %v487
  %491 = vrot.lane.b32.xlu0 %v489, 64
  %v492 = vpop.permute.xlu0 %491
  %v494 = vadd.f32 %v401, %v492
  %v495 = vtanh.pop %v494
  %v496 = vsub.f32 1.0, %v483
  %498 = vrot.lane.b32.xlu0 %v495, 96
  %v499 = vpop.permute.xlu0 %498
  %v501 = vmul.f32 %v496, %v499
  %v502 = vmul.f32 %v483, %v399
  %v503 = vadd.f32 %v501, %v502
  %s504 = sadd.s32 %s31, 3
  %v505 = vstv %s504
  %vm506 = vcmp.lt.s32.totalorder %v505, %v25
  %v507 = vsel %vm506, 1, 0
  %508 = vset.pattern.permute.xlu0 0
  %509 = vperm.xlu0 %508, %v507
  %v510 = vpop.permute.xlu0 %509
  %vm511 = vcmp.eq.s32.totalorder %v510, 1
  %v512 = vsel %vm511, %v503, 0.0
  %514 = vrot.lane.b32.xlu0 %v512, 96
  %v515 = vpop.permute.xlu0 %514
  %s517 = scalar_lea.vmem %s4, 24
  %518 = vst.msk [vmem:[%s517] sm:$0xff] %vm34, %v515
  %v519 = vsel %vm511, %v503, %v399
  %s520 = scalar_lea.vmem %s0, 32
  %v521 = vld [vmem:[%s520] sm:$0xff]
  %523 = vrot.lane.b32.xlu0 %v519, 96
  %v524 = vpop.permute.xlu0 %523
  %v525 = vsel %vm34, %v524, 0
  %527 = vmatprep.subr.mxu0 0.0
  %528 = vmatpush1.msra.mxu0 %v26
  %529 = vmatprep.subr.mxu0 0.0
  %530 = vmatpush1.msra.mxu0 %v27
  %531 = vmatprep.subr.mxu0 0.0
  %532 = vmatpush1.msra.mxu0 %v28
  %533 = vmatprep.subr.mxu0 0.0
  %534 = vmatpush1.msra.mxu0 %v29
  %535 = vmatprep.subr.mxu0 0.0
  %536 = vmatpush1.msra.mxu0 0.0
  %537 = vmatprep.subr.mxu0 0.0
  %538 = vmatpush1.msra.mxu0 0.0
  %539 = vmatprep.subr.mxu0 0.0
  %540 = vmatpush1.msra.mxu0 0.0
  %541 = vmatprep.subr.mxu0 0.0
  %542 = vmatpush1.msra.mxu0 0.0
  %543 = vmatprep.subr.mxu0 0.0
  %544 = vmatpush1.msra.mxu0 0.0
  %545 = vmatprep.subr.mxu0 0.0
  %546 = vmatpush1.msra.mxu0 0.0
  %547 = vmatprep.subr.mxu0 0.0
  %548 = vmatpush1.msra.mxu0 0.0
  %549 = vmatprep.subr.mxu0 0.0
  %550 = vmatpush1.msra.mxu0 0.0
  %551 = vmatprep.subr.mxu0 0.0
  %552 = vmatpush1.msra.mxu0 0.0
  %553 = vmatprep.subr.mxu0 0.0
  %554 = vmatpush1.msra.mxu0 0.0
  %555 = vmatprep.subr.mxu0 0.0
  %556 = vmatpush1.msra.mxu0 0.0
  %557 = vmatprep.subr.mxu0 0.0
  %558 = vmatpush1.msra.mxu0 0.0
  %559 = vmatprep.subr.mxu0 0.0
  %560 = vmatpush1.msra.mxu0 0.0
  %561 = vmatprep.subr.mxu0 0.0
  %562 = vmatpush1.msra.mxu0 0.0
  %563 = vmatprep.subr.mxu0 0.0
  %564 = vmatpush1.msra.mxu0 0.0
  %565 = vmatprep.subr.mxu0 0.0
  %566 = vmatpush1.msra.mxu0 0.0
  %567 = vmatprep.subr.mxu0 0.0
  %568 = vmatpush1.msra.mxu0 0.0
  %569 = vmatprep.subr.mxu0 0.0
  %570 = vmatpush1.msra.mxu0 0.0
  %571 = vmatprep.subr.mxu0 0.0
  %572 = vmatpush1.msra.mxu0 0.0
  %573 = vmatprep.subr.mxu0 0.0
  %574 = vmatpush1.msra.mxu0 0.0
  %575 = vmatprep.subr.mxu0 0.0
  %576 = vmatpush1.msra.mxu0 0.0
  %577 = vmatprep.subr.mxu0 0.0
  %578 = vmatpush1.msra.mxu0 0.0
  %579 = vmatprep.subr.mxu0 0.0
  %580 = vmatpush1.msra.mxu0 0.0
  %581 = vmatprep.subr.mxu0 0.0
  %582 = vmatpush1.msra.mxu0 0.0
  %583 = vmatprep.subr.mxu0 0.0
  %584 = vmatpush1.msra.mxu0 0.0
  %585 = vmatprep.subr.mxu0 0.0
  %586 = vmatpush1.msra.mxu0 0.0
  %587 = vmatprep.subr.mxu0 0.0
  %588 = vmatpush1.msra.mxu0 0.0
  %589 = vmatprep.subr.mxu0 0.0
  %590 = vmatpush1.msra.mxu0 0.0
  %591 = vmatprep.mubr.f32.mxu0 0.0
  %592 = vmatmul.mubr.f32.gmra.mrb[0].mxu0 %v525
  %v593 = vpop.f32.mrb[0].mxu0
  %v594 = vadd.f32 0.0, %v593
  %v595 = vpop.f32.mrb[0].mxu0
  %596 = vdwg.mxu0
  %v597 = vadd.f32 %v521, %v594
  %v598 = vxor.u32 %v597, 2147483648
  %v599 = vmul.f32 %v598, 1.442695
  %v600 = vpow.pop %v599
  %v601 = vadd.f32 %v600, 1.0
  %v602 = vrcp.pop %v601
  %v603 = vmul.f32 1.0, %v602
  %v604 = vadd.f32 %v594, %v121
  %606 = vrot.lane.b32.xlu0 %v604, 64
  %v607 = vpop.permute.xlu0 %606
  %v609 = vmul.f32 %v603, %v607
  %611 = vrot.lane.b32.xlu0 %v609, 64
  %v612 = vpop.permute.xlu0 %611
  %v614 = vadd.f32 %v521, %v612
  %v615 = vtanh.pop %v614
  %v616 = vsub.f32 1.0, %v603
  %618 = vrot.lane.b32.xlu0 %v615, 96
  %v619 = vpop.permute.xlu0 %618
  %v621 = vmul.f32 %v616, %v619
  %v622 = vmul.f32 %v603, %v519
  %v623 = vadd.f32 %v621, %v622
  %s624 = sadd.s32 %s31, 4
  %v625 = vstv %s624
  %vm626 = vcmp.lt.s32.totalorder %v625, %v25
  %v627 = vsel %vm626, 1, 0
  %628 = vset.pattern.permute.xlu0 0
  %629 = vperm.xlu0 %628, %v627
  %v630 = vpop.permute.xlu0 %629
  %vm631 = vcmp.eq.s32.totalorder %v630, 1
  %v632 = vsel %vm631, %v623, 0.0
  %634 = vrot.lane.b32.xlu0 %v632, 96
  %v635 = vpop.permute.xlu0 %634
  %s637 = scalar_lea.vmem %s4, 32
  %638 = vst.msk [vmem:[%s637] sm:$0xff] %vm34, %v635
  %v639 = vsel %vm631, %v623, %v519
  %s640 = scalar_lea.vmem %s0, 40
  %v641 = vld [vmem:[%s640] sm:$0xff]
  %643 = vrot.lane.b32.xlu0 %v639, 96
  %v644 = vpop.permute.xlu0 %643
  %v645 = vsel %vm34, %v644, 0
  %647 = vmatprep.subr.mxu0 0.0
  %648 = vmatpush1.msra.mxu0 %v26
  %649 = vmatprep.subr.mxu0 0.0
  %650 = vmatpush1.msra.mxu0 %v27
  %651 = vmatprep.subr.mxu0 0.0
  %652 = vmatpush1.msra.mxu0 %v28
  %653 = vmatprep.subr.mxu0 0.0
  %654 = vmatpush1.msra.mxu0 %v29
  %655 = vmatprep.subr.mxu0 0.0
  %656 = vmatpush1.msra.mxu0 0.0
  %657 = vmatprep.subr.mxu0 0.0
  %658 = vmatpush1.msra.mxu0 0.0
  %659 = vmatprep.subr.mxu0 0.0
  %660 = vmatpush1.msra.mxu0 0.0
  %661 = vmatprep.subr.mxu0 0.0
  %662 = vmatpush1.msra.mxu0 0.0
  %663 = vmatprep.subr.mxu0 0.0
  %664 = vmatpush1.msra.mxu0 0.0
  %665 = vmatprep.subr.mxu0 0.0
  %666 = vmatpush1.msra.mxu0 0.0
  %667 = vmatprep.subr.mxu0 0.0
  %668 = vmatpush1.msra.mxu0 0.0
  %669 = vmatprep.subr.mxu0 0.0
  %670 = vmatpush1.msra.mxu0 0.0
  %671 = vmatprep.subr.mxu0 0.0
  %672 = vmatpush1.msra.mxu0 0.0
  %673 = vmatprep.subr.mxu0 0.0
  %674 = vmatpush1.msra.mxu0 0.0
  %675 = vmatprep.subr.mxu0 0.0
  %676 = vmatpush1.msra.mxu0 0.0
  %677 = vmatprep.subr.mxu0 0.0
  %678 = vmatpush1.msra.mxu0 0.0
  %679 = vmatprep.subr.mxu0 0.0
  %680 = vmatpush1.msra.mxu0 0.0
  %681 = vmatprep.subr.mxu0 0.0
  %682 = vmatpush1.msra.mxu0 0.0
  %683 = vmatprep.subr.mxu0 0.0
  %684 = vmatpush1.msra.mxu0 0.0
  %685 = vmatprep.subr.mxu0 0.0
  %686 = vmatpush1.msra.mxu0 0.0
  %687 = vmatprep.subr.mxu0 0.0
  %688 = vmatpush1.msra.mxu0 0.0
  %689 = vmatprep.subr.mxu0 0.0
  %690 = vmatpush1.msra.mxu0 0.0
  %691 = vmatprep.subr.mxu0 0.0
  %692 = vmatpush1.msra.mxu0 0.0
  %693 = vmatprep.subr.mxu0 0.0
  %694 = vmatpush1.msra.mxu0 0.0
  %695 = vmatprep.subr.mxu0 0.0
  %696 = vmatpush1.msra.mxu0 0.0
  %697 = vmatprep.subr.mxu0 0.0
  %698 = vmatpush1.msra.mxu0 0.0
  %699 = vmatprep.subr.mxu0 0.0
  %700 = vmatpush1.msra.mxu0 0.0
  %701 = vmatprep.subr.mxu0 0.0
  %702 = vmatpush1.msra.mxu0 0.0
  %703 = vmatprep.subr.mxu0 0.0
  %704 = vmatpush1.msra.mxu0 0.0
  %705 = vmatprep.subr.mxu0 0.0
  %706 = vmatpush1.msra.mxu0 0.0
  %707 = vmatprep.subr.mxu0 0.0
  %708 = vmatpush1.msra.mxu0 0.0
  %709 = vmatprep.subr.mxu0 0.0
  %710 = vmatpush1.msra.mxu0 0.0
  %711 = vmatprep.mubr.f32.mxu0 0.0
  %712 = vmatmul.mubr.f32.gmra.mrb[0].mxu0 %v645
  %v713 = vpop.f32.mrb[0].mxu0
  %v714 = vadd.f32 0.0, %v713
  %v715 = vpop.f32.mrb[0].mxu0
  %716 = vdwg.mxu0
  %v717 = vadd.f32 %v641, %v714
  %v718 = vxor.u32 %v717, 2147483648
  %v719 = vmul.f32 %v718, 1.442695
  %v720 = vpow.pop %v719
  %v721 = vadd.f32 %v720, 1.0
  %v722 = vrcp.pop %v721
  %v723 = vmul.f32 1.0, %v722
  %v724 = vadd.f32 %v714, %v121
  %726 = vrot.lane.b32.xlu0 %v724, 64
  %v727 = vpop.permute.xlu0 %726
  %v729 = vmul.f32 %v723, %v727
  %731 = vrot.lane.b32.xlu0 %v729, 64
  %v732 = vpop.permute.xlu0 %731
  %v734 = vadd.f32 %v641, %v732
  %v735 = vtanh.pop %v734
  %v736 = vsub.f32 1.0, %v723
  %738 = vrot.lane.b32.xlu0 %v735, 96
  %v739 = vpop.permute.xlu0 %738
  %v741 = vmul.f32 %v736, %v739
  %v742 = vmul.f32 %v723, %v639
  %v743 = vadd.f32 %v741, %v742
  %s744 = sadd.s32 %s31, 5
  %v745 = vstv %s744
  %vm746 = vcmp.lt.s32.totalorder %v745, %v25
  %v747 = vsel %vm746, 1, 0
  %748 = vset.pattern.permute.xlu0 0
  %749 = vperm.xlu0 %748, %v747
  %v750 = vpop.permute.xlu0 %749
  %vm751 = vcmp.eq.s32.totalorder %v750, 1
  %v752 = vsel %vm751, %v743, 0.0
  %754 = vrot.lane.b32.xlu0 %v752, 96
  %v755 = vpop.permute.xlu0 %754
  %s757 = scalar_lea.vmem %s4, 40
  %758 = vst.msk [vmem:[%s757] sm:$0xff] %vm34, %v755
  %v759 = vsel %vm751, %v743, %v639
  %s760 = scalar_lea.vmem %s0, 48
  %v761 = vld [vmem:[%s760] sm:$0xff]
  %763 = vrot.lane.b32.xlu0 %v759, 96
  %v764 = vpop.permute.xlu0 %763
  %v765 = vsel %vm34, %v764, 0
  %767 = vmatprep.subr.mxu0 0.0
  %768 = vmatpush1.msra.mxu0 %v26
  %769 = vmatprep.subr.mxu0 0.0
  %770 = vmatpush1.msra.mxu0 %v27
  %771 = vmatprep.subr.mxu0 0.0
  %772 = vmatpush1.msra.mxu0 %v28
  %773 = vmatprep.subr.mxu0 0.0
  %774 = vmatpush1.msra.mxu0 %v29
  %775 = vmatprep.subr.mxu0 0.0
  %776 = vmatpush1.msra.mxu0 0.0
  %777 = vmatprep.subr.mxu0 0.0
  %778 = vmatpush1.msra.mxu0 0.0
  %779 = vmatprep.subr.mxu0 0.0
  %780 = vmatpush1.msra.mxu0 0.0
  %781 = vmatprep.subr.mxu0 0.0
  %782 = vmatpush1.msra.mxu0 0.0
  %783 = vmatprep.subr.mxu0 0.0
  %784 = vmatpush1.msra.mxu0 0.0
  %785 = vmatprep.subr.mxu0 0.0
  %786 = vmatpush1.msra.mxu0 0.0
  %787 = vmatprep.subr.mxu0 0.0
  %788 = vmatpush1.msra.mxu0 0.0
  %789 = vmatprep.subr.mxu0 0.0
  %790 = vmatpush1.msra.mxu0 0.0
  %791 = vmatprep.subr.mxu0 0.0
  %792 = vmatpush1.msra.mxu0 0.0
  %793 = vmatprep.subr.mxu0 0.0
  %794 = vmatpush1.msra.mxu0 0.0
  %795 = vmatprep.subr.mxu0 0.0
  %796 = vmatpush1.msra.mxu0 0.0
  %797 = vmatprep.subr.mxu0 0.0
  %798 = vmatpush1.msra.mxu0 0.0
  %799 = vmatprep.subr.mxu0 0.0
  %800 = vmatpush1.msra.mxu0 0.0
  %801 = vmatprep.subr.mxu0 0.0
  %802 = vmatpush1.msra.mxu0 0.0
  %803 = vmatprep.subr.mxu0 0.0
  %804 = vmatpush1.msra.mxu0 0.0
  %805 = vmatprep.subr.mxu0 0.0
  %806 = vmatpush1.msra.mxu0 0.0
  %807 = vmatprep.subr.mxu0 0.0
  %808 = vmatpush1.msra.mxu0 0.0
  %809 = vmatprep.subr.mxu0 0.0
  %810 = vmatpush1.msra.mxu0 0.0
  %811 = vmatprep.subr.mxu0 0.0
  %812 = vmatpush1.msra.mxu0 0.0
  %813 = vmatprep.subr.mxu0 0.0
  %814 = vmatpush1.msra.mxu0 0.0
  %815 = vmatprep.subr.mxu0 0.0
  %816 = vmatpush1.msra.mxu0 0.0
  %817 = vmatprep.subr.mxu0 0.0
  %818 = vmatpush1.msra.mxu0 0.0
  %819 = vmatprep.subr.mxu0 0.0
  %820 = vmatpush1.msra.mxu0 0.0
  %821 = vmatprep.subr.mxu0 0.0
  %822 = vmatpush1.msra.mxu0 0.0
  %823 = vmatprep.subr.mxu0 0.0
  %824 = vmatpush1.msra.mxu0 0.0
  %825 = vmatprep.subr.mxu0 0.0
  %826 = vmatpush1.msra.mxu0 0.0
  %827 = vmatprep.subr.mxu0 0.0
  %828 = vmatpush1.msra.mxu0 0.0
  %829 = vmatprep.subr.mxu0 0.0
  %830 = vmatpush1.msra.mxu0 0.0
  %831 = vmatprep.mubr.f32.mxu0 0.0
  %832 = vmatmul.mubr.f32.gmra.mrb[0].mxu0 %v765
  %v833 = vpop.f32.mrb[0].mxu0
  %v834 = vadd.f32 0.0, %v833
  %v835 = vpop.f32.mrb[0].mxu0
  %836 = vdwg.mxu0
  %v837 = vadd.f32 %v761, %v834
  %v838 = vxor.u32 %v837, 2147483648
  %v839 = vmul.f32 %v838, 1.442695
  %v840 = vpow.pop %v839
  %v841 = vadd.f32 %v840, 1.0
  %v842 = vrcp.pop %v841
  %v843 = vmul.f32 1.0, %v842
  %v844 = vadd.f32 %v834, %v121
  %846 = vrot.lane.b32.xlu0 %v844, 64
  %v847 = vpop.permute.xlu0 %846
  %v849 = vmul.f32 %v843, %v847
  %851 = vrot.lane.b32.xlu0 %v849, 64
  %v852 = vpop.permute.xlu0 %851
  %v854 = vadd.f32 %v761, %v852
  %v855 = vtanh.pop %v854
  %v856 = vsub.f32 1.0, %v843
  %858 = vrot.lane.b32.xlu0 %v855, 96
  %v859 = vpop.permute.xlu0 %858
  %v861 = vmul.f32 %v856, %v859
  %v862 = vmul.f32 %v843, %v759
  %v863 = vadd.f32 %v861, %v862
  %s864 = sadd.s32 %s31, 6
  %v865 = vstv %s864
  %vm866 = vcmp.lt.s32.totalorder %v865, %v25
  %v867 = vsel %vm866, 1, 0
  %868 = vset.pattern.permute.xlu0 0
  %869 = vperm.xlu0 %868, %v867
  %v870 = vpop.permute.xlu0 %869
  %vm871 = vcmp.eq.s32.totalorder %v870, 1
  %v872 = vsel %vm871, %v863, 0.0
  %874 = vrot.lane.b32.xlu0 %v872, 96
  %v875 = vpop.permute.xlu0 %874
  %s877 = scalar_lea.vmem %s4, 48
  %878 = vst.msk [vmem:[%s877] sm:$0xff] %vm34, %v875
  %v879 = vsel %vm871, %v863, %v759
  %s880 = scalar_lea.vmem %s0, 56
  %v881 = vld [vmem:[%s880] sm:$0xff]
  %883 = vrot.lane.b32.xlu0 %v879, 96
  %v884 = vpop.permute.xlu0 %883
  %v885 = vsel %vm34, %v884, 0
  %887 = vmatprep.subr.mxu0 0.0
  %888 = vmatpush1.msra.mxu0 %v26
  %889 = vmatprep.subr.mxu0 0.0
  %890 = vmatpush1.msra.mxu0 %v27
  %891 = vmatprep.subr.mxu0 0.0
  %892 = vmatpush1.msra.mxu0 %v28
  %893 = vmatprep.subr.mxu0 0.0
  %894 = vmatpush1.msra.mxu0 %v29
  %895 = vmatprep.subr.mxu0 0.0
  %896 = vmatpush1.msra.mxu0 0.0
  %897 = vmatprep.subr.mxu0 0.0
  %898 = vmatpush1.msra.mxu0 0.0
  %899 = vmatprep.subr.mxu0 0.0
  %900 = vmatpush1.msra.mxu0 0.0
  %901 = vmatprep.subr.mxu0 0.0
  %902 = vmatpush1.msra.mxu0 0.0
  %903 = vmatprep.subr.mxu0 0.0
  %904 = vmatpush1.msra.mxu0 0.0
  %905 = vmatprep.subr.mxu0 0.0
  %906 = vmatpush1.msra.mxu0 0.0
  %907 = vmatprep.subr.mxu0 0.0
  %908 = vmatpush1.msra.mxu0 0.0
  %909 = vmatprep.subr.mxu0 0.0
  %910 = vmatpush1.msra.mxu0 0.0
  %911 = vmatprep.subr.mxu0 0.0
  %912 = vmatpush1.msra.mxu0 0.0
  %913 = vmatprep.subr.mxu0 0.0
  %914 = vmatpush1.msra.mxu0 0.0
  %915 = vmatprep.subr.mxu0 0.0
  %916 = vmatpush1.msra.mxu0 0.0
  %917 = vmatprep.subr.mxu0 0.0
  %918 = vmatpush1.msra.mxu0 0.0
  %919 = vmatprep.subr.mxu0 0.0
  %920 = vmatpush1.msra.mxu0 0.0
  %921 = vmatprep.subr.mxu0 0.0
  %922 = vmatpush1.msra.mxu0 0.0
  %923 = vmatprep.subr.mxu0 0.0
  %924 = vmatpush1.msra.mxu0 0.0
  %925 = vmatprep.subr.mxu0 0.0
  %926 = vmatpush1.msra.mxu0 0.0
  %927 = vmatprep.subr.mxu0 0.0
  %928 = vmatpush1.msra.mxu0 0.0
  %929 = vmatprep.subr.mxu0 0.0
  %930 = vmatpush1.msra.mxu0 0.0
  %931 = vmatprep.subr.mxu0 0.0
  %932 = vmatpush1.msra.mxu0 0.0
  %933 = vmatprep.subr.mxu0 0.0
  %934 = vmatpush1.msra.mxu0 0.0
  %935 = vmatprep.subr.mxu0 0.0
  %936 = vmatpush1.msra.mxu0 0.0
  %937 = vmatprep.subr.mxu0 0.0
  %938 = vmatpush1.msra.mxu0 0.0
  %939 = vmatprep.subr.mxu0 0.0
  %940 = vmatpush1.msra.mxu0 0.0
  %941 = vmatprep.subr.mxu0 0.0
  %942 = vmatpush1.msra.mxu0 0.0
  %943 = vmatprep.subr.mxu0 0.0
  %944 = vmatpush1.msra.mxu0 0.0
  %945 = vmatprep.subr.mxu0 0.0
  %946 = vmatpush1.msra.mxu0 0.0
  %947 = vmatprep.subr.mxu0 0.0
  %948 = vmatpush1.msra.mxu0 0.0
  %949 = vmatprep.subr.mxu0 0.0
  %950 = vmatpush1.msra.mxu0 0.0
  %951 = vmatprep.mubr.f32.mxu0 0.0
  %952 = vmatmul.mubr.f32.gmra.mrb[0].mxu0 %v885
  %v953 = vpop.f32.mrb[0].mxu0
  %v954 = vadd.f32 0.0, %v953
  %v955 = vpop.f32.mrb[0].mxu0
  %956 = vdwg.mxu0
  %v957 = vadd.f32 %v881, %v954
  %v958 = vxor.u32 %v957, 2147483648
  %v959 = vmul.f32 %v958, 1.442695
  %v960 = vpow.pop %v959
  %v961 = vadd.f32 %v960, 1.0
  %v962 = vrcp.pop %v961
  %v963 = vmul.f32 1.0, %v962
  %v964 = vadd.f32 %v954, %v121
  %966 = vrot.lane.b32.xlu0 %v964, 64
  %v967 = vpop.permute.xlu0 %966
  %v969 = vmul.f32 %v963, %v967
  %971 = vrot.lane.b32.xlu0 %v969, 64
  %v972 = vpop.permute.xlu0 %971
  %v974 = vadd.f32 %v881, %v972
  %v975 = vtanh.pop %v974
  %v976 = vsub.f32 1.0, %v963
  %978 = vrot.lane.b32.xlu0 %v975, 96
  %v979 = vpop.permute.xlu0 %978
  %v981 = vmul.f32 %v976, %v979
  %v982 = vmul.f32 %v963, %v879
  %v983 = vadd.f32 %v981, %v982
  %s984 = sadd.s32 %s31, 7
  %v985 = vstv %s984
  %vm986 = vcmp.lt.s32.totalorder %v985, %v25
  %v987 = vsel %vm986, 1, 0
  %988 = vset.pattern.permute.xlu0 0
  %989 = vperm.xlu0 %988, %v987
  %v990 = vpop.permute.xlu0 %989
  %vm991 = vcmp.eq.s32.totalorder %v990, 1
  %v992 = vsel %vm991, %v983, 0.0
  %994 = vrot.lane.b32.xlu0 %v992, 96
  %v995 = vpop.permute.xlu0 %994
  %s997 = scalar_lea.vmem %s4, 56
  %998 = vst.msk [vmem:[%s997] sm:$0xff] %vm34, %v995
  %v999 = vsel %vm991, %v983, %v879
  %1001 = vrot.lane.b32.xlu0 %v999, 96
  %v1002 = vpop.permute.xlu0 %1001
  %1004 = vst.msk [vmem:[#allocation2] sm:$0xff] %vm34, %v1002
  // Predicated region
  $region22: #{encoder_forward.1} parent=0 // pred_check
    %p1005 = pneg %p19
  $region23: #{encoder_forward.1} parent=0 // pred_check_branch
    %1007 = sbr.rel (%p1005) target = $region25
  $region24: #{encoder_forward.1} parent=0 // pred_region
    %1008 = vst.msk [vmem:[%s5] sm:$0xff] %vm34, %v1002
  $region25: #{encoder_forward.1} parent=0 // pred_fallthru
    _
  // Predicated region
  $region26: #{encoder_forward.1} parent=0 // pred_check
    _
  $region27: #{encoder_forward.1} parent=0 // pred_check_branch
    %1010 = sbr.rel (0) target = $region29
  $region28: #{encoder_forward.1} parent=0 // pred_region
    _
  $region29: #{encoder_forward.1} parent=0 // pred_fallthru
    _
  // Predicated region
  $region30: #{encoder_forward.1} parent=0 // pred_check
    _
  $region31: #{encoder_forward.1} parent=0 // pred_check_branch
    %1012 = sbr.rel (0) target = $region33
  $region32: #{encoder_forward.1} parent=0 // pred_region
    _
  $region33: #{encoder_forward.1} parent=0 // pred_fallthru
    _
  // Predicated region
  $region34: #{encoder_forward.1} parent=0 // pred_check
    _
  $region35: #{encoder_forward.1} parent=0 // pred_check_branch
    %1014 = sbr.rel (0) target = $region37
  $region36: #{encoder_forward.1} parent=0 // pred_region
    _
  $region37: #{encoder_forward.1} parent=0 // pred_fallthru
    _
  // Predicated region
  $region38: #{encoder_forward.1} parent=0 // pred_check
    _
  $region39: #{encoder_forward.1} parent=0 // pred_check_branch
    %1016 = sbr.rel (0) target = $region41
  $region40: #{encoder_forward.1} parent=0 // pred_region
    _
  $region41: #{encoder_forward.1} parent=0 // pred_fallthru
    _

</llo_original>
